<compile_context>
chip_gen: v5e
topology: v5e:2x2
jax: 0.10.0
libtpu: 0.0.40
codegen_flags: <defaults>
</compile_context>

<pallas_src>
import math

import jax
import jax.numpy as jnp
from jax import lax
from jax.experimental import pallas as pl
from jax.experimental.pallas import tpu as pltpu

BN_EPS = 1e-5      # torch.nn.BatchNorm1d default eps
NORM_EPS = 1e-12   # torch.nn.functional.normalize default eps
LANE = 128


def conv_layer_kernel(idx_sref, lin_ref, nd_ref, dirw_ref, scale_ref, shift_ref,
                      out_ref, gat_ref):
    """One (batch, vertex-tile) step: gather + theta + BN-affine + relu + max."""
    V, Cp = lin_ref.shape[1], lin_ref.shape[2]
    N, VT = nd_ref.shape[1], nd_ref.shape[2]

    b = pl.program_id(0)
    t = pl.program_id(1)
    base = (b * V + t * VT) * N        # flat offset of this tile's first (v, n) index

    scale = scale_ref[...]             # (1, Cp)  BN scale  (gamma / sqrt(var+eps))
    shift = shift_ref[...]             # (1, Cp)  BN shift  (beta - mean*scale)
    sd1 = dirw_ref[0:1, :]             # directions[1] - directions[0]
    sd2 = dirw_ref[1:2, :]             # directions[2] - directions[0]
    sd3 = dirw_ref[2:3, :]             # directions[3] - directions[0]
    d0 = dirw_ref[3:4, :]              # directions[0]

    acc = None
    for n in range(N):                 # N is small and static
        # ---- real row gather of linU for neighbor n (scalar-driven VMEM copy) ----
        def gather_row(v, carry):
            src = idx_sref[base + v * N + n]
            gat_ref[pl.ds(v, 1), :] = lin_ref[0, pl.ds(src, 1), :]
            return carry
        lax.fori_loop(0, VT, gather_row, 0)
        g = gat_ref[...]                                        # (VT, Cp)

        # ---- neighbor direction normalize (explicit sumsq + rsqrt, EUP) ----
        nd_n = nd_ref[0, n]                                     # (VT, 3) raw direction
        dx = nd_n[:, 0:1]
        dy = nd_n[:, 1:2]
        dz = nd_n[:, 2:3]
        inv = lax.rsqrt(jnp.maximum(dx * dx + dy * dy + dz * dz,
                                    NORM_EPS * NORM_EPS))       # 1 / max(|d|, eps)
        wx = (dx * inv + 1.0) * 0.5
        wy = (dy * inv + 1.0) * 0.5
        wz = (dz * inv + 1.0) * 0.5

        # ---- theta = relu(ndnw @ sdnw + d0) as three broadcast FMAs ----
        theta = jnp.maximum(wx * sd1 + wy * sd2 + wz * sd3 + d0, 0.0)   # (VT, Cp)

        # ---- BN affine + relu, weight by theta, fold into the running max ----
        act = jnp.maximum(g * scale + shift, 0.0) * theta               # (VT, Cp)
        acc = act if acc is None else jnp.maximum(acc, act)

    out_ref[0] = acc


def conv_layer_forward(neighbor_index, vertices, feature_map, params, v_tile=None):
    bs, V, N = neighbor_index.shape
    Cout = params["W"].shape[1]
    Cp = ((Cout + LANE - 1) // LANE) * LANE       # lane-dense channel dim
    pad = Cp - Cout
    f32 = jnp.float32

    # zero-padded extra channels are inert through linear / BN / theta / max
    w_p = jnp.pad(params["W"].astype(f32), ((0, 0), (0, pad)))
    dirs_p = jnp.pad(params["directions"].astype(f32), ((0, 0), (0, pad)))
    gamma_p = jnp.pad(params["gamma"].astype(f32), ((0, 0), (0, pad)))
    beta_p = jnp.pad(params["beta"].astype(f32), ((0, 0), (0, pad)))
    # params["b"] (nn.Linear bias) is intentionally not used: it cancels exactly
    # inside training-mode BatchNorm.

    idx = jnp.clip(neighbor_index.astype(jnp.int32), 0, V - 1)   # defined OOB behavior

    # ---- linU computed exactly once (also feeds the BN statistics) ----
    linU = jnp.einsum("bvi,ic->bvc", feature_map.astype(f32), w_p)      # (bs, V, Cp)

    # ---- training-mode BatchNorm1d stats over the gathered rows, as tiny
    #      multiplicity-weighted XLA reductions (no Pallas kernel needed) ----
    counts = jnp.zeros((bs, V), f32).at[
        jnp.arange(bs)[:, None], idx.reshape(bs, V * N)].add(1.0)
    total = float(bs * V * N)
    s1 = jnp.einsum("bv,bvc->c", counts, linU) / total                  # E[x]
    s2 = jnp.einsum("bv,bvc->c", counts, linU * linU) / total           # E[x^2]
    var = jnp.maximum(s2 - s1 * s1, 0.0)                                # biased var
    inv = lax.rsqrt(var + BN_EPS)
    scale = (inv * gamma_p[0])[None, :]                                 # (1, Cp)
    shift = (beta_p[0] - s1 * inv * gamma_p[0])[None, :]                # (1, Cp)

    # ---- raw neighbor directions (tiny 3-channel gather), neighbor-major ----
    nbrs = vertices[jnp.arange(bs)[:, None, None], idx]                 # (bs, V, N, 3)
    nd = jnp.transpose(nbrs - vertices[:, :, None, :], (0, 2, 1, 3))    # (bs, N, V, 3)
    nd = nd.astype(f32)

    # ---- support-direction rows: [d1-d0, d2-d0, d3-d0, d0] ----
    dirw = jnp.concatenate([dirs_p[1:4] - dirs_p[0:1], dirs_p[0:1]], axis=0)  # (4, Cp)

    # ---- V-tile: second parallel grid axis so v7x's two TCs stay busy even at
    #      small bs; largest divisor of V that is <= 512 ----
    if v_tile is None:
        v_tile = V
        for cand in (512, 256, 128, 64, 32, 16, 8):
            if V >= cand and V % cand == 0:
                v_tile = cand
                break

    grid_spec = pltpu.PrefetchScalarGridSpec(
        num_scalar_prefetch=1,                       # neighbor indices -> SMEM
        grid=(bs, V // v_tile),
        in_specs=[
            pl.BlockSpec((1, V, Cp), lambda b, t, idx_s: (b, 0, 0)),        # linU
            pl.BlockSpec((1, N, v_tile, 3), lambda b, t, idx_s: (b, 0, t, 0)),  # nd
            pl.BlockSpec((4, Cp), lambda b, t, idx_s: (0, 0)),              # dirw
            pl.BlockSpec((1, Cp), lambda b, t, idx_s: (0, 0)),              # scale
            pl.BlockSpec((1, Cp), lambda b, t, idx_s: (0, 0)),              # shift
        ],
        out_specs=pl.BlockSpec((1, v_tile, Cp), lambda b, t, idx_s: (b, t, 0)),
        scratch_shapes=[pltpu.VMEM((v_tile, Cp), f32)],                     # gather buf
    )

    out_p = pl.pallas_call(
        conv_layer_kernel,
        grid_spec=grid_spec,
        out_shape=jax.ShapeDtypeStruct((bs, V, Cp), f32),
        compiler_params=pltpu.CompilerParams(
            dimension_semantics=("parallel", "parallel")),
    )(idx.reshape(-1), linU, nd, dirw, scale, shift)

    return out_p[:, :, :Cout]


def init_params(key, in_channel, out_channel):
    k1, k2, k3 = jax.random.split(key, 3)
    bound = 1.0 / math.sqrt(in_channel)             # nn.Linear default init range
    W = jax.random.uniform(k1, (in_channel, out_channel), jnp.float32, -bound, bound)
    b = jax.random.uniform(k2, (1, out_channel), jnp.float32, -bound, bound)
    stdv = math.sqrt(2.0 / out_channel)             # module.initialize()
    directions = jax.random.uniform(k3, (4, out_channel), jnp.float32, -stdv, stdv)
    gamma = jnp.ones((1, out_channel), jnp.float32)   # BatchNorm1d defaults
    beta = jnp.zeros((1, out_channel), jnp.float32)
    return dict(W=W, b=b, directions=directions, gamma=gamma, beta=beta)


def reference_forward(neighbor_index, vertices, feature_map, params):
    """Pure-JAX reference mirroring the PyTorch forward (training-mode BN)."""
    bs, V, N = neighbor_index.shape
    id0 = jnp.arange(bs)[:, None, None]
    nbrs = vertices[id0, neighbor_index]                     # (bs,V,N,3)
    d = nbrs - vertices[:, :, None, :]
    nrm = jnp.linalg.norm(d, axis=-1, keepdims=True)
    dn = d / jnp.maximum(nrm, NORM_EPS)
    ndnw = (dn + 1.0) / 2.0
    dirs = params["directions"]
    sdnw = jnp.stack([dirs[1] - dirs[0], dirs[2] - dirs[0], dirs[3] - dirs[0]], 0)
    theta = jnp.maximum(ndnw @ sdnw + dirs[0], 0.0)          # (bs,V,N,Cout)
    fs = feature_map[id0, neighbor_index]                    # (bs,V,N,Cin)
    lin = fs @ params["W"] + params["b"][0]
    flat = lin.reshape(-1, lin.shape[-1])
    mean = flat.mean(0)
    var = flat.var(0)                                        # biased variance
    h = (lin - mean) / jnp.sqrt(var + BN_EPS) * params["gamma"][0] + params["beta"][0]
    h = jnp.maximum(h, 0.0)
    return jnp.max(h * theta, axis=2)


if __name__ == "__main__":
    bs, V, N = 2, 16, 8
    in_channel, out_channel = 16, 32

    key = jax.random.PRNGKey(0)
    k_idx, k_vert, k_feat, k_par = jax.random.split(key, 4)
    neighbor_index = jax.random.randint(k_idx, (bs, V, N), 0, V, dtype=jnp.int32)
    vertices = jax.random.normal(k_vert, (bs, V, 3), jnp.float32)
    feature_map = jax.random.normal(k_feat, (bs, V, in_channel), jnp.float32)
    params = init_params(k_par, in_channel, out_channel)

    fwd = jax.jit(conv_layer_forward)
    out = fwd(neighbor_index, vertices, feature_map, params)
    out = jax.block_until_ready(out)

    ref = reference_forward(neighbor_index, vertices, feature_map, params)
    assert out.shape == (bs, V, out_channel)
    assert jnp.allclose(out, ref, atol=2e-4, rtol=2e-4), \
        float(jnp.max(jnp.abs(out - ref)))
    print("KERNEL_OK")
</pallas_src>

<mosaic_0001>
module attributes {stable_mosaic.version = 11 : i64} {
  func.func @conv_layer_kernel(%arg0: i32, %arg1: i32, %arg2: memref<256xi32, #tpu.memory_space<smem>>, %arg3: memref<1x16x128xf32, #tpu.memory_space<vmem>>, %arg4: memref<1x8x16x3xf32, #tpu.memory_space<vmem>>, %arg5: memref<4x128xf32, #tpu.memory_space<vmem>>, %arg6: memref<1x128xf32, #tpu.memory_space<vmem>>, %arg7: memref<1x128xf32, #tpu.memory_space<vmem>>, %arg8: memref<1x16x128xf32, #tpu.memory_space<vmem>>, %arg9: memref<16x128xf32, #tpu.memory_space<vmem>>) attributes {dimension_semantics = [#tpu.dimension_semantics<parallel>, #tpu.dimension_semantics<parallel>], iteration_bounds = array<i64: 2, 1>, scalar_prefetch = 1 : i64, scratch_operands = 1 : i64, tpu.core_type = #tpu.core_type<tc>, window_params = [{transform_indices = @transform_0, window_bounds = array<i64: 1, 16, 128>}, {transform_indices = @transform_1, window_bounds = array<i64: 1, 8, 16, 3>}, {pipeline_mode = #tpu.pipeline_mode<synchronous>, transform_indices = @transform_2, window_bounds = array<i64: 4, 128>}, {pipeline_mode = #tpu.pipeline_mode<synchronous>, transform_indices = @transform_3, window_bounds = array<i64: 1, 128>}, {pipeline_mode = #tpu.pipeline_mode<synchronous>, transform_indices = @transform_4, window_bounds = array<i64: 1, 128>}, {transform_indices = @transform_5, window_bounds = array<i64: 1, 16, 128>}]} {
    %c16_i32 = arith.constant 16 : i32
    %0 = arith.muli %arg0, %c16_i32 : i32
    %c16_i32_0 = arith.constant 16 : i32
    %1 = arith.muli %arg1, %c16_i32_0 : i32
    %2 = arith.addi %0, %1 : i32
    %c8_i32 = arith.constant 8 : i32
    %3 = arith.muli %2, %c8_i32 : i32
    %c0 = arith.constant 0 : index
    %c0_1 = arith.constant 0 : index
    %4 = vector.load %arg6[%c0, %c0_1] : memref<1x128xf32, #tpu.memory_space<vmem>>, vector<1x128xf32>
    %c0_2 = arith.constant 0 : index
    %c0_3 = arith.constant 0 : index
    %5 = vector.load %arg7[%c0_2, %c0_3] : memref<1x128xf32, #tpu.memory_space<vmem>>, vector<1x128xf32>
    %c0_4 = arith.constant 0 : index
    %c0_5 = arith.constant 0 : index
    %6 = vector.load %arg5[%c0_4, %c0_5] : memref<4x128xf32, #tpu.memory_space<vmem>>, vector<1x128xf32>
    %c1 = arith.constant 1 : index
    %c0_6 = arith.constant 0 : index
    %7 = vector.load %arg5[%c1, %c0_6] : memref<4x128xf32, #tpu.memory_space<vmem>>, vector<1x128xf32>
    %c2 = arith.constant 2 : index
    %c0_7 = arith.constant 0 : index
    %8 = vector.load %arg5[%c2, %c0_7] : memref<4x128xf32, #tpu.memory_space<vmem>>, vector<1x128xf32>
    %c3 = arith.constant 3 : index
    %c0_8 = arith.constant 0 : index
    %9 = vector.load %arg5[%c3, %c0_8] : memref<4x128xf32, #tpu.memory_space<vmem>>, vector<1x128xf32>
    %c0_i32 = arith.constant 0 : i32
    %c16_i32_9 = arith.constant 16 : i32
    %10 = arith.addi %c0_i32, %c16_i32_9 : i32
    %c1_i32 = arith.constant 1 : i32
    scf.for %arg10 = %c0_i32 to %10 step %c1_i32  : i32 {
      %c8_i32_157 = arith.constant 8 : i32
      %436 = arith.muli %arg10, %c8_i32_157 : i32
      %437 = arith.addi %3, %436 : i32
      %c0_i32_158 = arith.constant 0 : i32
      %438 = arith.addi %437, %c0_i32_158 : i32
      %439 = arith.index_cast %438 : i32 to index
      %440 = memref.load %arg2[%439] : memref<256xi32, #tpu.memory_space<smem>>
      %c0_159 = arith.constant 0 : index
      %441 = arith.index_cast %440 : i32 to index
      %c0_160 = arith.constant 0 : index
      %442 = vector.load %arg3[%c0_159, %441, %c0_160] : memref<1x16x128xf32, #tpu.memory_space<vmem>>, vector<1x1x128xf32>
      %443 = vector.shape_cast %442 : vector<1x1x128xf32> to vector<1x128xf32>
      %444 = arith.index_cast %arg10 : i32 to index
      %c0_161 = arith.constant 0 : index
      %445 = vector.load %arg9[%444, %c0_161] : memref<16x128xf32, #tpu.memory_space<vmem>>, vector<1x128xf32>
      tpu.vector_store %arg9[%444, %c0_161], %443 {strides = array<i32>} : memref<16x128xf32, #tpu.memory_space<vmem>>, vector<1x128xf32>,
    }
    %c16_i32_10 = arith.constant 16 : i32
    %c0_11 = arith.constant 0 : index
    %c0_12 = arith.constant 0 : index
    %11 = vector.load %arg9[%c0_11, %c0_12] : memref<16x128xf32, #tpu.memory_space<vmem>>, vector<16x128xf32>
    %c0_13 = arith.constant 0 : index
    %c0_14 = arith.constant 0 : index
    %c0_15 = arith.constant 0 : index
    %c0_16 = arith.constant 0 : index
    %12 = vector.load %arg4[%c0_13, %c0_14, %c0_15, %c0_16] : memref<1x8x16x3xf32, #tpu.memory_space<vmem>>, vector<1x1x16x3xf32>
    %13 = vector.shape_cast %12 : vector<1x1x16x3xf32> to vector<16x3xf32>
    %14 = vector.extract_strided_slice %13 {offsets = [0, 0], sizes = [16, 1], strides = [1, 1]} : vector<16x3xf32> to vector<16x1xf32>
    %15 = vector.extract_strided_slice %13 {offsets = [0, 1], sizes = [16, 1], strides = [1, 1]} : vector<16x3xf32> to vector<16x1xf32>
    %16 = vector.extract_strided_slice %13 {offsets = [0, 2], sizes = [16, 1], strides = [1, 1]} : vector<16x3xf32> to vector<16x1xf32>
    %17 = arith.mulf %14, %14 : vector<16x1xf32>
    %18 = arith.mulf %15, %15 : vector<16x1xf32>
    %19 = arith.addf %17, %18 : vector<16x1xf32>
    %20 = arith.mulf %16, %16 : vector<16x1xf32>
    %21 = arith.addf %19, %20 : vector<16x1xf32>
    %cst = arith.constant 1.000000e-24 : f32
    %22 = vector.broadcast %cst : f32 to vector<16x1xf32>
    %23 = arith.maximumf %21, %22 : vector<16x1xf32>
    %24 = math.rsqrt %23 : vector<16x1xf32>
    %25 = arith.mulf %14, %24 : vector<16x1xf32>
    %cst_17 = arith.constant 1.000000e+00 : f32
    %26 = vector.broadcast %cst_17 : f32 to vector<16x1xf32>
    %27 = arith.addf %25, %26 : vector<16x1xf32>
    %cst_18 = arith.constant 5.000000e-01 : f32
    %28 = vector.broadcast %cst_18 : f32 to vector<16x1xf32>
    %29 = arith.mulf %27, %28 : vector<16x1xf32>
    %30 = arith.mulf %15, %24 : vector<16x1xf32>
    %cst_19 = arith.constant 1.000000e+00 : f32
    %31 = vector.broadcast %cst_19 : f32 to vector<16x1xf32>
    %32 = arith.addf %30, %31 : vector<16x1xf32>
    %cst_20 = arith.constant 5.000000e-01 : f32
    %33 = vector.broadcast %cst_20 : f32 to vector<16x1xf32>
    %34 = arith.mulf %32, %33 : vector<16x1xf32>
    %35 = arith.mulf %16, %24 : vector<16x1xf32>
    %cst_21 = arith.constant 1.000000e+00 : f32
    %36 = vector.broadcast %cst_21 : f32 to vector<16x1xf32>
    %37 = arith.addf %35, %36 : vector<16x1xf32>
    %cst_22 = arith.constant 5.000000e-01 : f32
    %38 = vector.broadcast %cst_22 : f32 to vector<16x1xf32>
    %39 = arith.mulf %37, %38 : vector<16x1xf32>
    %40 = vector.broadcast %29 : vector<16x1xf32> to vector<16x128xf32>
    %41 = vector.broadcast %6 : vector<1x128xf32> to vector<16x128xf32>
    %42 = arith.mulf %40, %41 : vector<16x128xf32>
    %43 = vector.broadcast %34 : vector<16x1xf32> to vector<16x128xf32>
    %44 = vector.broadcast %7 : vector<1x128xf32> to vector<16x128xf32>
    %45 = arith.mulf %43, %44 : vector<16x128xf32>
    %46 = arith.addf %42, %45 : vector<16x128xf32>
    %47 = vector.broadcast %39 : vector<16x1xf32> to vector<16x128xf32>
    %48 = vector.broadcast %8 : vector<1x128xf32> to vector<16x128xf32>
    %49 = arith.mulf %47, %48 : vector<16x128xf32>
    %50 = arith.addf %46, %49 : vector<16x128xf32>
    %51 = vector.broadcast %9 : vector<1x128xf32> to vector<16x128xf32>
    %52 = arith.addf %50, %51 : vector<16x128xf32>
    %cst_23 = arith.constant 0.000000e+00 : f32
    %53 = vector.broadcast %cst_23 : f32 to vector<16x128xf32>
    %54 = arith.maximumf %52, %53 : vector<16x128xf32>
    %55 = vector.broadcast %4 : vector<1x128xf32> to vector<16x128xf32>
    %56 = arith.mulf %11, %55 : vector<16x128xf32>
    %57 = vector.broadcast %5 : vector<1x128xf32> to vector<16x128xf32>
    %58 = arith.addf %56, %57 : vector<16x128xf32>
    %cst_24 = arith.constant 0.000000e+00 : f32
    %59 = vector.broadcast %cst_24 : f32 to vector<16x128xf32>
    %60 = arith.maximumf %58, %59 : vector<16x128xf32>
    %61 = arith.mulf %60, %54 : vector<16x128xf32>
    %c0_i32_25 = arith.constant 0 : i32
    %c16_i32_26 = arith.constant 16 : i32
    %62 = arith.addi %c0_i32_25, %c16_i32_26 : i32
    %c1_i32_27 = arith.constant 1 : i32
    scf.for %arg10 = %c0_i32_25 to %62 step %c1_i32_27  : i32 {
      %c8_i32_157 = arith.constant 8 : i32
      %436 = arith.muli %arg10, %c8_i32_157 : i32
      %437 = arith.addi %3, %436 : i32
      %c1_i32_158 = arith.constant 1 : i32
      %438 = arith.addi %437, %c1_i32_158 : i32
      %439 = arith.index_cast %438 : i32 to index
      %440 = memref.load %arg2[%439] : memref<256xi32, #tpu.memory_space<smem>>
      %c0_159 = arith.constant 0 : index
      %441 = arith.index_cast %440 : i32 to index
      %c0_160 = arith.constant 0 : index
      %442 = vector.load %arg3[%c0_159, %441, %c0_160] : memref<1x16x128xf32, #tpu.memory_space<vmem>>, vector<1x1x128xf32>
      %443 = vector.shape_cast %442 : vector<1x1x128xf32> to vector<1x128xf32>
      %444 = arith.index_cast %arg10 : i32 to index
      %c0_161 = arith.constant 0 : index
      %445 = vector.load %arg9[%444, %c0_161] : memref<16x128xf32, #tpu.memory_space<vmem>>, vector<1x128xf32>
      tpu.vector_store %arg9[%444, %c0_161], %443 {strides = array<i32>} : memref<16x128xf32, #tpu.memory_space<vmem>>, vector<1x128xf32>,
    }
    %c16_i32_28 = arith.constant 16 : i32
    %c0_29 = arith.constant 0 : index
    %c0_30 = arith.constant 0 : index
    %63 = vector.load %arg9[%c0_29, %c0_30] : memref<16x128xf32, #tpu.memory_space<vmem>>, vector<16x128xf32>
    %c0_31 = arith.constant 0 : index
    %c1_32 = arith.constant 1 : index
    %c0_33 = arith.constant 0 : index
    %c0_34 = arith.constant 0 : index
    %64 = vector.load %arg4[%c0_31, %c1_32, %c0_33, %c0_34] : memref<1x8x16x3xf32, #tpu.memory_space<vmem>>, vector<1x1x16x3xf32>
    %65 = vector.shape_cast %64 : vector<1x1x16x3xf32> to vector<16x3xf32>
    %66 = vector.extract_strided_slice %65 {offsets = [0, 0], sizes = [16, 1], strides = [1, 1]} : vector<16x3xf32> to vector<16x1xf32>
    %67 = vector.extract_strided_slice %65 {offsets = [0, 1], sizes = [16, 1], strides = [1, 1]} : vector<16x3xf32> to vector<16x1xf32>
    %68 = vector.extract_strided_slice %65 {offsets = [0, 2], sizes = [16, 1], strides = [1, 1]} : vector<16x3xf32> to vector<16x1xf32>
    %69 = arith.mulf %66, %66 : vector<16x1xf32>
    %70 = arith.mulf %67, %67 : vector<16x1xf32>
    %71 = arith.addf %69, %70 : vector<16x1xf32>
    %72 = arith.mulf %68, %68 : vector<16x1xf32>
    %73 = arith.addf %71, %72 : vector<16x1xf32>
    %cst_35 = arith.constant 1.000000e-24 : f32
    %74 = vector.broadcast %cst_35 : f32 to vector<16x1xf32>
    %75 = arith.maximumf %73, %74 : vector<16x1xf32>
    %76 = math.rsqrt %75 : vector<16x1xf32>
    %77 = arith.mulf %66, %76 : vector<16x1xf32>
    %cst_36 = arith.constant 1.000000e+00 : f32
    %78 = vector.broadcast %cst_36 : f32 to vector<16x1xf32>
    %79 = arith.addf %77, %78 : vector<16x1xf32>
    %cst_37 = arith.constant 5.000000e-01 : f32
    %80 = vector.broadcast %cst_37 : f32 to vector<16x1xf32>
    %81 = arith.mulf %79, %80 : vector<16x1xf32>
    %82 = arith.mulf %67, %76 : vector<16x1xf32>
    %cst_38 = arith.constant 1.000000e+00 : f32
    %83 = vector.broadcast %cst_38 : f32 to vector<16x1xf32>
    %84 = arith.addf %82, %83 : vector<16x1xf32>
    %cst_39 = arith.constant 5.000000e-01 : f32
    %85 = vector.broadcast %cst_39 : f32 to vector<16x1xf32>
    %86 = arith.mulf %84, %85 : vector<16x1xf32>
    %87 = arith.mulf %68, %76 : vector<16x1xf32>
    %cst_40 = arith.constant 1.000000e+00 : f32
    %88 = vector.broadcast %cst_40 : f32 to vector<16x1xf32>
    %89 = arith.addf %87, %88 : vector<16x1xf32>
    %cst_41 = arith.constant 5.000000e-01 : f32
    %90 = vector.broadcast %cst_41 : f32 to vector<16x1xf32>
    %91 = arith.mulf %89, %90 : vector<16x1xf32>
    %92 = vector.broadcast %81 : vector<16x1xf32> to vector<16x128xf32>
    %93 = vector.broadcast %6 : vector<1x128xf32> to vector<16x128xf32>
    %94 = arith.mulf %92, %93 : vector<16x128xf32>
    %95 = vector.broadcast %86 : vector<16x1xf32> to vector<16x128xf32>
    %96 = vector.broadcast %7 : vector<1x128xf32> to vector<16x128xf32>
    %97 = arith.mulf %95, %96 : vector<16x128xf32>
    %98 = arith.addf %94, %97 : vector<16x128xf32>
    %99 = vector.broadcast %91 : vector<16x1xf32> to vector<16x128xf32>
    %100 = vector.broadcast %8 : vector<1x128xf32> to vector<16x128xf32>
    %101 = arith.mulf %99, %100 : vector<16x128xf32>
    %102 = arith.addf %98, %101 : vector<16x128xf32>
    %103 = vector.broadcast %9 : vector<1x128xf32> to vector<16x128xf32>
    %104 = arith.addf %102, %103 : vector<16x128xf32>
    %cst_42 = arith.constant 0.000000e+00 : f32
    %105 = vector.broadcast %cst_42 : f32 to vector<16x128xf32>
    %106 = arith.maximumf %104, %105 : vector<16x128xf32>
    %107 = vector.broadcast %4 : vector<1x128xf32> to vector<16x128xf32>
    %108 = arith.mulf %63, %107 : vector<16x128xf32>
    %109 = vector.broadcast %5 : vector<1x128xf32> to vector<16x128xf32>
    %110 = arith.addf %108, %109 : vector<16x128xf32>
    %cst_43 = arith.constant 0.000000e+00 : f32
    %111 = vector.broadcast %cst_43 : f32 to vector<16x128xf32>
    %112 = arith.maximumf %110, %111 : vector<16x128xf32>
    %113 = arith.mulf %112, %106 : vector<16x128xf32>
    %114 = arith.maximumf %61, %113 : vector<16x128xf32>
    %c0_i32_44 = arith.constant 0 : i32
    %c16_i32_45 = arith.constant 16 : i32
    %115 = arith.addi %c0_i32_44, %c16_i32_45 : i32
    %c1_i32_46 = arith.constant 1 : i32
    scf.for %arg10 = %c0_i32_44 to %115 step %c1_i32_46  : i32 {
      %c8_i32_157 = arith.constant 8 : i32
      %436 = arith.muli %arg10, %c8_i32_157 : i32
      %437 = arith.addi %3, %436 : i32
      %c2_i32 = arith.constant 2 : i32
      %438 = arith.addi %437, %c2_i32 : i32
      %439 = arith.index_cast %438 : i32 to index
      %440 = memref.load %arg2[%439] : memref<256xi32, #tpu.memory_space<smem>>
      %c0_158 = arith.constant 0 : index
      %441 = arith.index_cast %440 : i32 to index
      %c0_159 = arith.constant 0 : index
      %442 = vector.load %arg3[%c0_158, %441, %c0_159] : memref<1x16x128xf32, #tpu.memory_space<vmem>>, vector<1x1x128xf32>
      %443 = vector.shape_cast %442 : vector<1x1x128xf32> to vector<1x128xf32>
      %444 = arith.index_cast %arg10 : i32 to index
      %c0_160 = arith.constant 0 : index
      %445 = vector.load %arg9[%444, %c0_160] : memref<16x128xf32, #tpu.memory_space<vmem>>, vector<1x128xf32>
      tpu.vector_store %arg9[%444, %c0_160], %443 {strides = array<i32>} : memref<16x128xf32, #tpu.memory_space<vmem>>, vector<1x128xf32>,
    }
    %c16_i32_47 = arith.constant 16 : i32
    %c0_48 = arith.constant 0 : index
    %c0_49 = arith.constant 0 : index
    %116 = vector.load %arg9[%c0_48, %c0_49] : memref<16x128xf32, #tpu.memory_space<vmem>>, vector<16x128xf32>
    %c0_50 = arith.constant 0 : index
    %c2_51 = arith.constant 2 : index
    %c0_52 = arith.constant 0 : index
    %c0_53 = arith.constant 0 : index
    %117 = vector.load %arg4[%c0_50, %c2_51, %c0_52, %c0_53] : memref<1x8x16x3xf32, #tpu.memory_space<vmem>>, vector<1x1x16x3xf32>
    %118 = vector.shape_cast %117 : vector<1x1x16x3xf32> to vector<16x3xf32>
    %119 = vector.extract_strided_slice %118 {offsets = [0, 0], sizes = [16, 1], strides = [1, 1]} : vector<16x3xf32> to vector<16x1xf32>
    %120 = vector.extract_strided_slice %118 {offsets = [0, 1], sizes = [16, 1], strides = [1, 1]} : vector<16x3xf32> to vector<16x1xf32>
    %121 = vector.extract_strided_slice %118 {offsets = [0, 2], sizes = [16, 1], strides = [1, 1]} : vector<16x3xf32> to vector<16x1xf32>
    %122 = arith.mulf %119, %119 : vector<16x1xf32>
    %123 = arith.mulf %120, %120 : vector<16x1xf32>
    %124 = arith.addf %122, %123 : vector<16x1xf32>
    %125 = arith.mulf %121, %121 : vector<16x1xf32>
    %126 = arith.addf %124, %125 : vector<16x1xf32>
    %cst_54 = arith.constant 1.000000e-24 : f32
    %127 = vector.broadcast %cst_54 : f32 to vector<16x1xf32>
    %128 = arith.maximumf %126, %127 : vector<16x1xf32>
    %129 = math.rsqrt %128 : vector<16x1xf32>
    %130 = arith.mulf %119, %129 : vector<16x1xf32>
    %cst_55 = arith.constant 1.000000e+00 : f32
    %131 = vector.broadcast %cst_55 : f32 to vector<16x1xf32>
    %132 = arith.addf %130, %131 : vector<16x1xf32>
    %cst_56 = arith.constant 5.000000e-01 : f32
    %133 = vector.broadcast %cst_56 : f32 to vector<16x1xf32>
    %134 = arith.mulf %132, %133 : vector<16x1xf32>
    %135 = arith.mulf %120, %129 : vector<16x1xf32>
    %cst_57 = arith.constant 1.000000e+00 : f32
    %136 = vector.broadcast %cst_57 : f32 to vector<16x1xf32>
    %137 = arith.addf %135, %136 : vector<16x1xf32>
    %cst_58 = arith.constant 5.000000e-01 : f32
    %138 = vector.broadcast %cst_58 : f32 to vector<16x1xf32>
    %139 = arith.mulf %137, %138 : vector<16x1xf32>
    %140 = arith.mulf %121, %129 : vector<16x1xf32>
    %cst_59 = arith.constant 1.000000e+00 : f32
    %141 = vector.broadcast %cst_59 : f32 to vector<16x1xf32>
    %142 = arith.addf %140, %141 : vector<16x1xf32>
    %cst_60 = arith.constant 5.000000e-01 : f32
    %143 = vector.broadcast %cst_60 : f32 to vector<16x1xf32>
    %144 = arith.mulf %142, %143 : vector<16x1xf32>
    %145 = vector.broadcast %134 : vector<16x1xf32> to vector<16x128xf32>
    %146 = vector.broadcast %6 : vector<1x128xf32> to vector<16x128xf32>
    %147 = arith.mulf %145, %146 : vector<16x128xf32>
    %148 = vector.broadcast %139 : vector<16x1xf32> to vector<16x128xf32>
    %149 = vector.broadcast %7 : vector<1x128xf32> to vector<16x128xf32>
    %150 = arith.mulf %148, %149 : vector<16x128xf32>
    %151 = arith.addf %147, %150 : vector<16x128xf32>
    %152 = vector.broadcast %144 : vector<16x1xf32> to vector<16x128xf32>
    %153 = vector.broadcast %8 : vector<1x128xf32> to vector<16x128xf32>
    %154 = arith.mulf %152, %153 : vector<16x128xf32>
    %155 = arith.addf %151, %154 : vector<16x128xf32>
    %156 = vector.broadcast %9 : vector<1x128xf32> to vector<16x128xf32>
    %157 = arith.addf %155, %156 : vector<16x128xf32>
    %cst_61 = arith.constant 0.000000e+00 : f32
    %158 = vector.broadcast %cst_61 : f32 to vector<16x128xf32>
    %159 = arith.maximumf %157, %158 : vector<16x128xf32>
    %160 = vector.broadcast %4 : vector<1x128xf32> to vector<16x128xf32>
    %161 = arith.mulf %116, %160 : vector<16x128xf32>
    %162 = vector.broadcast %5 : vector<1x128xf32> to vector<16x128xf32>
    %163 = arith.addf %161, %162 : vector<16x128xf32>
    %cst_62 = arith.constant 0.000000e+00 : f32
    %164 = vector.broadcast %cst_62 : f32 to vector<16x128xf32>
    %165 = arith.maximumf %163, %164 : vector<16x128xf32>
    %166 = arith.mulf %165, %159 : vector<16x128xf32>
    %167 = arith.maximumf %114, %166 : vector<16x128xf32>
    %c0_i32_63 = arith.constant 0 : i32
    %c16_i32_64 = arith.constant 16 : i32
    %168 = arith.addi %c0_i32_63, %c16_i32_64 : i32
    %c1_i32_65 = arith.constant 1 : i32
    scf.for %arg10 = %c0_i32_63 to %168 step %c1_i32_65  : i32 {
      %c8_i32_157 = arith.constant 8 : i32
      %436 = arith.muli %arg10, %c8_i32_157 : i32
      %437 = arith.addi %3, %436 : i32
      %c3_i32 = arith.constant 3 : i32
      %438 = arith.addi %437, %c3_i32 : i32
      %439 = arith.index_cast %438 : i32 to index
      %440 = memref.load %arg2[%439] : memref<256xi32, #tpu.memory_space<smem>>
      %c0_158 = arith.constant 0 : index
      %441 = arith.index_cast %440 : i32 to index
      %c0_159 = arith.constant 0 : index
      %442 = vector.load %arg3[%c0_158, %441, %c0_159] : memref<1x16x128xf32, #tpu.memory_space<vmem>>, vector<1x1x128xf32>
      %443 = vector.shape_cast %442 : vector<1x1x128xf32> to vector<1x128xf32>
      %444 = arith.index_cast %arg10 : i32 to index
      %c0_160 = arith.constant 0 : index
      %445 = vector.load %arg9[%444, %c0_160] : memref<16x128xf32, #tpu.memory_space<vmem>>, vector<1x128xf32>
      tpu.vector_store %arg9[%444, %c0_160], %443 {strides = array<i32>} : memref<16x128xf32, #tpu.memory_space<vmem>>, vector<1x128xf32>,
    }
    %c16_i32_66 = arith.constant 16 : i32
    %c0_67 = arith.constant 0 : index
    %c0_68 = arith.constant 0 : index
    %169 = vector.load %arg9[%c0_67, %c0_68] : memref<16x128xf32, #tpu.memory_space<vmem>>, vector<16x128xf32>
    %c0_69 = arith.constant 0 : index
    %c3_70 = arith.constant 3 : index
    %c0_71 = arith.constant 0 : index
    %c0_72 = arith.constant 0 : index
    %170 = vector.load %arg4[%c0_69, %c3_70, %c0_71, %c0_72] : memref<1x8x16x3xf32, #tpu.memory_space<vmem>>, vector<1x1x16x3xf32>
    %171 = vector.shape_cast %170 : vector<1x1x16x3xf32> to vector<16x3xf32>
    %172 = vector.extract_strided_slice %171 {offsets = [0, 0], sizes = [16, 1], strides = [1, 1]} : vector<16x3xf32> to vector<16x1xf32>
    %173 = vector.extract_strided_slice %171 {offsets = [0, 1], sizes = [16, 1], strides = [1, 1]} : vector<16x3xf32> to vector<16x1xf32>
    %174 = vector.extract_strided_slice %171 {offsets = [0, 2], sizes = [16, 1], strides = [1, 1]} : vector<16x3xf32> to vector<16x1xf32>
    %175 = arith.mulf %172, %172 : vector<16x1xf32>
    %176 = arith.mulf %173, %173 : vector<16x1xf32>
    %177 = arith.addf %175, %176 : vector<16x1xf32>
    %178 = arith.mulf %174, %174 : vector<16x1xf32>
    %179 = arith.addf %177, %178 : vector<16x1xf32>
    %cst_73 = arith.constant 1.000000e-24 : f32
    %180 = vector.broadcast %cst_73 : f32 to vector<16x1xf32>
    %181 = arith.maximumf %179, %180 : vector<16x1xf32>
    %182 = math.rsqrt %181 : vector<16x1xf32>
    %183 = arith.mulf %172, %182 : vector<16x1xf32>
    %cst_74 = arith.constant 1.000000e+00 : f32
    %184 = vector.broadcast %cst_74 : f32 to vector<16x1xf32>
    %185 = arith.addf %183, %184 : vector<16x1xf32>
    %cst_75 = arith.constant 5.000000e-01 : f32
    %186 = vector.broadcast %cst_75 : f32 to vector<16x1xf32>
    %187 = arith.mulf %185, %186 : vector<16x1xf32>
    %188 = arith.mulf %173, %182 : vector<16x1xf32>
    %cst_76 = arith.constant 1.000000e+00 : f32
    %189 = vector.broadcast %cst_76 : f32 to vector<16x1xf32>
    %190 = arith.addf %188, %189 : vector<16x1xf32>
    %cst_77 = arith.constant 5.000000e-01 : f32
    %191 = vector.broadcast %cst_77 : f32 to vector<16x1xf32>
    %192 = arith.mulf %190, %191 : vector<16x1xf32>
    %193 = arith.mulf %174, %182 : vector<16x1xf32>
    %cst_78 = arith.constant 1.000000e+00 : f32
    %194 = vector.broadcast %cst_78 : f32 to vector<16x1xf32>
    %195 = arith.addf %193, %194 : vector<16x1xf32>
    %cst_79 = arith.constant 5.000000e-01 : f32
    %196 = vector.broadcast %cst_79 : f32 to vector<16x1xf32>
    %197 = arith.mulf %195, %196 : vector<16x1xf32>
    %198 = vector.broadcast %187 : vector<16x1xf32> to vector<16x128xf32>
    %199 = vector.broadcast %6 : vector<1x128xf32> to vector<16x128xf32>
    %200 = arith.mulf %198, %199 : vector<16x128xf32>
    %201 = vector.broadcast %192 : vector<16x1xf32> to vector<16x128xf32>
    %202 = vector.broadcast %7 : vector<1x128xf32> to vector<16x128xf32>
    %203 = arith.mulf %201, %202 : vector<16x128xf32>
    %204 = arith.addf %200, %203 : vector<16x128xf32>
    %205 = vector.broadcast %197 : vector<16x1xf32> to vector<16x128xf32>
    %206 = vector.broadcast %8 : vector<1x128xf32> to vector<16x128xf32>
    %207 = arith.mulf %205, %206 : vector<16x128xf32>
    %208 = arith.addf %204, %207 : vector<16x128xf32>
    %209 = vector.broadcast %9 : vector<1x128xf32> to vector<16x128xf32>
    %210 = arith.addf %208, %209 : vector<16x128xf32>
    %cst_80 = arith.constant 0.000000e+00 : f32
    %211 = vector.broadcast %cst_80 : f32 to vector<16x128xf32>
    %212 = arith.maximumf %210, %211 : vector<16x128xf32>
    %213 = vector.broadcast %4 : vector<1x128xf32> to vector<16x128xf32>
    %214 = arith.mulf %169, %213 : vector<16x128xf32>
    %215 = vector.broadcast %5 : vector<1x128xf32> to vector<16x128xf32>
    %216 = arith.addf %214, %215 : vector<16x128xf32>
    %cst_81 = arith.constant 0.000000e+00 : f32
    %217 = vector.broadcast %cst_81 : f32 to vector<16x128xf32>
    %218 = arith.maximumf %216, %217 : vector<16x128xf32>
    %219 = arith.mulf %218, %212 : vector<16x128xf32>
    %220 = arith.maximumf %167, %219 : vector<16x128xf32>
    %c0_i32_82 = arith.constant 0 : i32
    %c16_i32_83 = arith.constant 16 : i32
    %221 = arith.addi %c0_i32_82, %c16_i32_83 : i32
    %c1_i32_84 = arith.constant 1 : i32
    scf.for %arg10 = %c0_i32_82 to %221 step %c1_i32_84  : i32 {
      %c8_i32_157 = arith.constant 8 : i32
      %436 = arith.muli %arg10, %c8_i32_157 : i32
      %437 = arith.addi %3, %436 : i32
      %c4_i32 = arith.constant 4 : i32
      %438 = arith.addi %437, %c4_i32 : i32
      %439 = arith.index_cast %438 : i32 to index
      %440 = memref.load %arg2[%439] : memref<256xi32, #tpu.memory_space<smem>>
      %c0_158 = arith.constant 0 : index
      %441 = arith.index_cast %440 : i32 to index
      %c0_159 = arith.constant 0 : index
      %442 = vector.load %arg3[%c0_158, %441, %c0_159] : memref<1x16x128xf32, #tpu.memory_space<vmem>>, vector<1x1x128xf32>
      %443 = vector.shape_cast %442 : vector<1x1x128xf32> to vector<1x128xf32>
      %444 = arith.index_cast %arg10 : i32 to index
      %c0_160 = arith.constant 0 : index
      %445 = vector.load %arg9[%444, %c0_160] : memref<16x128xf32, #tpu.memory_space<vmem>>, vector<1x128xf32>
      tpu.vector_store %arg9[%444, %c0_160], %443 {strides = array<i32>} : memref<16x128xf32, #tpu.memory_space<vmem>>, vector<1x128xf32>,
    }
    %c16_i32_85 = arith.constant 16 : i32
    %c0_86 = arith.constant 0 : index
    %c0_87 = arith.constant 0 : index
    %222 = vector.load %arg9[%c0_86, %c0_87] : memref<16x128xf32, #tpu.memory_space<vmem>>, vector<16x128xf32>
    %c0_88 = arith.constant 0 : index
    %c4 = arith.constant 4 : index
    %c0_89 = arith.constant 0 : index
    %c0_90 = arith.constant 0 : index
    %223 = vector.load %arg4[%c0_88, %c4, %c0_89, %c0_90] : memref<1x8x16x3xf32, #tpu.memory_space<vmem>>, vector<1x1x16x3xf32>
    %224 = vector.shape_cast %223 : vector<1x1x16x3xf32> to vector<16x3xf32>
    %225 = vector.extract_strided_slice %224 {offsets = [0, 0], sizes = [16, 1], strides = [1, 1]} : vector<16x3xf32> to vector<16x1xf32>
    %226 = vector.extract_strided_slice %224 {offsets = [0, 1], sizes = [16, 1], strides = [1, 1]} : vector<16x3xf32> to vector<16x1xf32>
    %227 = vector.extract_strided_slice %224 {offsets = [0, 2], sizes = [16, 1], strides = [1, 1]} : vector<16x3xf32> to vector<16x1xf32>
    %228 = arith.mulf %225, %225 : vector<16x1xf32>
    %229 = arith.mulf %226, %226 : vector<16x1xf32>
    %230 = arith.addf %228, %229 : vector<16x1xf32>
    %231 = arith.mulf %227, %227 : vector<16x1xf32>
    %232 = arith.addf %230, %231 : vector<16x1xf32>
    %cst_91 = arith.constant 1.000000e-24 : f32
    %233 = vector.broadcast %cst_91 : f32 to vector<16x1xf32>
    %234 = arith.maximumf %232, %233 : vector<16x1xf32>
    %235 = math.rsqrt %234 : vector<16x1xf32>
    %236 = arith.mulf %225, %235 : vector<16x1xf32>
    %cst_92 = arith.constant 1.000000e+00 : f32
    %237 = vector.broadcast %cst_92 : f32 to vector<16x1xf32>
    %238 = arith.addf %236, %237 : vector<16x1xf32>
    %cst_93 = arith.constant 5.000000e-01 : f32
    %239 = vector.broadcast %cst_93 : f32 to vector<16x1xf32>
    %240 = arith.mulf %238, %239 : vector<16x1xf32>
    %241 = arith.mulf %226, %235 : vector<16x1xf32>
    %cst_94 = arith.constant 1.000000e+00 : f32
    %242 = vector.broadcast %cst_94 : f32 to vector<16x1xf32>
    %243 = arith.addf %241, %242 : vector<16x1xf32>
    %cst_95 = arith.constant 5.000000e-01 : f32
    %244 = vector.broadcast %cst_95 : f32 to vector<16x1xf32>
    %245 = arith.mulf %243, %244 : vector<16x1xf32>
    %246 = arith.mulf %227, %235 : vector<16x1xf32>
    %cst_96 = arith.constant 1.000000e+00 : f32
    %247 = vector.broadcast %cst_96 : f32 to vector<16x1xf32>
    %248 = arith.addf %246, %247 : vector<16x1xf32>
    %cst_97 = arith.constant 5.000000e-01 : f32
    %249 = vector.broadcast %cst_97 : f32 to vector<16x1xf32>
    %250 = arith.mulf %248, %249 : vector<16x1xf32>
    %251 = vector.broadcast %240 : vector<16x1xf32> to vector<16x128xf32>
    %252 = vector.broadcast %6 : vector<1x128xf32> to vector<16x128xf32>
    %253 = arith.mulf %251, %252 : vector<16x128xf32>
    %254 = vector.broadcast %245 : vector<16x1xf32> to vector<16x128xf32>
    %255 = vector.broadcast %7 : vector<1x128xf32> to vector<16x128xf32>
    %256 = arith.mulf %254, %255 : vector<16x128xf32>
    %257 = arith.addf %253, %256 : vector<16x128xf32>
    %258 = vector.broadcast %250 : vector<16x1xf32> to vector<16x128xf32>
    %259 = vector.broadcast %8 : vector<1x128xf32> to vector<16x128xf32>
    %260 = arith.mulf %258, %259 : vector<16x128xf32>
    %261 = arith.addf %257, %260 : vector<16x128xf32>
    %262 = vector.broadcast %9 : vector<1x128xf32> to vector<16x128xf32>
    %263 = arith.addf %261, %262 : vector<16x128xf32>
    %cst_98 = arith.constant 0.000000e+00 : f32
    %264 = vector.broadcast %cst_98 : f32 to vector<16x128xf32>
    %265 = arith.maximumf %263, %264 : vector<16x128xf32>
    %266 = vector.broadcast %4 : vector<1x128xf32> to vector<16x128xf32>
    %267 = arith.mulf %222, %266 : vector<16x128xf32>
    %268 = vector.broadcast %5 : vector<1x128xf32> to vector<16x128xf32>
    %269 = arith.addf %267, %268 : vector<16x128xf32>
    %cst_99 = arith.constant 0.000000e+00 : f32
    %270 = vector.broadcast %cst_99 : f32 to vector<16x128xf32>
    %271 = arith.maximumf %269, %270 : vector<16x128xf32>
    %272 = arith.mulf %271, %265 : vector<16x128xf32>
    %273 = arith.maximumf %220, %272 : vector<16x128xf32>
    %c0_i32_100 = arith.constant 0 : i32
    %c16_i32_101 = arith.constant 16 : i32
    %274 = arith.addi %c0_i32_100, %c16_i32_101 : i32
    %c1_i32_102 = arith.constant 1 : i32
    scf.for %arg10 = %c0_i32_100 to %274 step %c1_i32_102  : i32 {
      %c8_i32_157 = arith.constant 8 : i32
      %436 = arith.muli %arg10, %c8_i32_157 : i32
      %437 = arith.addi %3, %436 : i32
      %c5_i32 = arith.constant 5 : i32
      %438 = arith.addi %437, %c5_i32 : i32
      %439 = arith.index_cast %438 : i32 to index
      %440 = memref.load %arg2[%439] : memref<256xi32, #tpu.memory_space<smem>>
      %c0_158 = arith.constant 0 : index
      %441 = arith.index_cast %440 : i32 to index
      %c0_159 = arith.constant 0 : index
      %442 = vector.load %arg3[%c0_158, %441, %c0_159] : memref<1x16x128xf32, #tpu.memory_space<vmem>>, vector<1x1x128xf32>
      %443 = vector.shape_cast %442 : vector<1x1x128xf32> to vector<1x128xf32>
      %444 = arith.index_cast %arg10 : i32 to index
      %c0_160 = arith.constant 0 : index
      %445 = vector.load %arg9[%444, %c0_160] : memref<16x128xf32, #tpu.memory_space<vmem>>, vector<1x128xf32>
      tpu.vector_store %arg9[%444, %c0_160], %443 {strides = array<i32>} : memref<16x128xf32, #tpu.memory_space<vmem>>, vector<1x128xf32>,
    }
    %c16_i32_103 = arith.constant 16 : i32
    %c0_104 = arith.constant 0 : index
    %c0_105 = arith.constant 0 : index
    %275 = vector.load %arg9[%c0_104, %c0_105] : memref<16x128xf32, #tpu.memory_space<vmem>>, vector<16x128xf32>
    %c0_106 = arith.constant 0 : index
    %c5 = arith.constant 5 : index
    %c0_107 = arith.constant 0 : index
    %c0_108 = arith.constant 0 : index
    %276 = vector.load %arg4[%c0_106, %c5, %c0_107, %c0_108] : memref<1x8x16x3xf32, #tpu.memory_space<vmem>>, vector<1x1x16x3xf32>
    %277 = vector.shape_cast %276 : vector<1x1x16x3xf32> to vector<16x3xf32>
    %278 = vector.extract_strided_slice %277 {offsets = [0, 0], sizes = [16, 1], strides = [1, 1]} : vector<16x3xf32> to vector<16x1xf32>
    %279 = vector.extract_strided_slice %277 {offsets = [0, 1], sizes = [16, 1], strides = [1, 1]} : vector<16x3xf32> to vector<16x1xf32>
    %280 = vector.extract_strided_slice %277 {offsets = [0, 2], sizes = [16, 1], strides = [1, 1]} : vector<16x3xf32> to vector<16x1xf32>
    %281 = arith.mulf %278, %278 : vector<16x1xf32>
    %282 = arith.mulf %279, %279 : vector<16x1xf32>
    %283 = arith.addf %281, %282 : vector<16x1xf32>
    %284 = arith.mulf %280, %280 : vector<16x1xf32>
    %285 = arith.addf %283, %284 : vector<16x1xf32>
    %cst_109 = arith.constant 1.000000e-24 : f32
    %286 = vector.broadcast %cst_109 : f32 to vector<16x1xf32>
    %287 = arith.maximumf %285, %286 : vector<16x1xf32>
    %288 = math.rsqrt %287 : vector<16x1xf32>
    %289 = arith.mulf %278, %288 : vector<16x1xf32>
    %cst_110 = arith.constant 1.000000e+00 : f32
    %290 = vector.broadcast %cst_110 : f32 to vector<16x1xf32>
    %291 = arith.addf %289, %290 : vector<16x1xf32>
    %cst_111 = arith.constant 5.000000e-01 : f32
    %292 = vector.broadcast %cst_111 : f32 to vector<16x1xf32>
    %293 = arith.mulf %291, %292 : vector<16x1xf32>
    %294 = arith.mulf %279, %288 : vector<16x1xf32>
    %cst_112 = arith.constant 1.000000e+00 : f32
    %295 = vector.broadcast %cst_112 : f32 to vector<16x1xf32>
    %296 = arith.addf %294, %295 : vector<16x1xf32>
    %cst_113 = arith.constant 5.000000e-01 : f32
    %297 = vector.broadcast %cst_113 : f32 to vector<16x1xf32>
    %298 = arith.mulf %296, %297 : vector<16x1xf32>
    %299 = arith.mulf %280, %288 : vector<16x1xf32>
    %cst_114 = arith.constant 1.000000e+00 : f32
    %300 = vector.broadcast %cst_114 : f32 to vector<16x1xf32>
    %301 = arith.addf %299, %300 : vector<16x1xf32>
    %cst_115 = arith.constant 5.000000e-01 : f32
    %302 = vector.broadcast %cst_115 : f32 to vector<16x1xf32>
    %303 = arith.mulf %301, %302 : vector<16x1xf32>
    %304 = vector.broadcast %293 : vector<16x1xf32> to vector<16x128xf32>
    %305 = vector.broadcast %6 : vector<1x128xf32> to vector<16x128xf32>
    %306 = arith.mulf %304, %305 : vector<16x128xf32>
    %307 = vector.broadcast %298 : vector<16x1xf32> to vector<16x128xf32>
    %308 = vector.broadcast %7 : vector<1x128xf32> to vector<16x128xf32>
    %309 = arith.mulf %307, %308 : vector<16x128xf32>
    %310 = arith.addf %306, %309 : vector<16x128xf32>
    %311 = vector.broadcast %303 : vector<16x1xf32> to vector<16x128xf32>
    %312 = vector.broadcast %8 : vector<1x128xf32> to vector<16x128xf32>
    %313 = arith.mulf %311, %312 : vector<16x128xf32>
    %314 = arith.addf %310, %313 : vector<16x128xf32>
    %315 = vector.broadcast %9 : vector<1x128xf32> to vector<16x128xf32>
    %316 = arith.addf %314, %315 : vector<16x128xf32>
    %cst_116 = arith.constant 0.000000e+00 : f32
    %317 = vector.broadcast %cst_116 : f32 to vector<16x128xf32>
    %318 = arith.maximumf %316, %317 : vector<16x128xf32>
    %319 = vector.broadcast %4 : vector<1x128xf32> to vector<16x128xf32>
    %320 = arith.mulf %275, %319 : vector<16x128xf32>
    %321 = vector.broadcast %5 : vector<1x128xf32> to vector<16x128xf32>
    %322 = arith.addf %320, %321 : vector<16x128xf32>
    %cst_117 = arith.constant 0.000000e+00 : f32
    %323 = vector.broadcast %cst_117 : f32 to vector<16x128xf32>
    %324 = arith.maximumf %322, %323 : vector<16x128xf32>
    %325 = arith.mulf %324, %318 : vector<16x128xf32>
    %326 = arith.maximumf %273, %325 : vector<16x128xf32>
    %c0_i32_118 = arith.constant 0 : i32
    %c16_i32_119 = arith.constant 16 : i32
    %327 = arith.addi %c0_i32_118, %c16_i32_119 : i32
    %c1_i32_120 = arith.constant 1 : i32
    scf.for %arg10 = %c0_i32_118 to %327 step %c1_i32_120  : i32 {
      %c8_i32_157 = arith.constant 8 : i32
      %436 = arith.muli %arg10, %c8_i32_157 : i32
      %437 = arith.addi %3, %436 : i32
      %c6_i32 = arith.constant 6 : i32
      %438 = arith.addi %437, %c6_i32 : i32
      %439 = arith.index_cast %438 : i32 to index
      %440 = memref.load %arg2[%439] : memref<256xi32, #tpu.memory_space<smem>>
      %c0_158 = arith.constant 0 : index
      %441 = arith.index_cast %440 : i32 to index
      %c0_159 = arith.constant 0 : index
      %442 = vector.load %arg3[%c0_158, %441, %c0_159] : memref<1x16x128xf32, #tpu.memory_space<vmem>>, vector<1x1x128xf32>
      %443 = vector.shape_cast %442 : vector<1x1x128xf32> to vector<1x128xf32>
      %444 = arith.index_cast %arg10 : i32 to index
      %c0_160 = arith.constant 0 : index
      %445 = vector.load %arg9[%444, %c0_160] : memref<16x128xf32, #tpu.memory_space<vmem>>, vector<1x128xf32>
      tpu.vector_store %arg9[%444, %c0_160], %443 {strides = array<i32>} : memref<16x128xf32, #tpu.memory_space<vmem>>, vector<1x128xf32>,
    }
    %c16_i32_121 = arith.constant 16 : i32
    %c0_122 = arith.constant 0 : index
    %c0_123 = arith.constant 0 : index
    %328 = vector.load %arg9[%c0_122, %c0_123] : memref<16x128xf32, #tpu.memory_space<vmem>>, vector<16x128xf32>
    %c0_124 = arith.constant 0 : index
    %c6 = arith.constant 6 : index
    %c0_125 = arith.constant 0 : index
    %c0_126 = arith.constant 0 : index
    %329 = vector.load %arg4[%c0_124, %c6, %c0_125, %c0_126] : memref<1x8x16x3xf32, #tpu.memory_space<vmem>>, vector<1x1x16x3xf32>
    %330 = vector.shape_cast %329 : vector<1x1x16x3xf32> to vector<16x3xf32>
    %331 = vector.extract_strided_slice %330 {offsets = [0, 0], sizes = [16, 1], strides = [1, 1]} : vector<16x3xf32> to vector<16x1xf32>
    %332 = vector.extract_strided_slice %330 {offsets = [0, 1], sizes = [16, 1], strides = [1, 1]} : vector<16x3xf32> to vector<16x1xf32>
    %333 = vector.extract_strided_slice %330 {offsets = [0, 2], sizes = [16, 1], strides = [1, 1]} : vector<16x3xf32> to vector<16x1xf32>
    %334 = arith.mulf %331, %331 : vector<16x1xf32>
    %335 = arith.mulf %332, %332 : vector<16x1xf32>
    %336 = arith.addf %334, %335 : vector<16x1xf32>
    %337 = arith.mulf %333, %333 : vector<16x1xf32>
    %338 = arith.addf %336, %337 : vector<16x1xf32>
    %cst_127 = arith.constant 1.000000e-24 : f32
    %339 = vector.broadcast %cst_127 : f32 to vector<16x1xf32>
    %340 = arith.maximumf %338, %339 : vector<16x1xf32>
    %341 = math.rsqrt %340 : vector<16x1xf32>
    %342 = arith.mulf %331, %341 : vector<16x1xf32>
    %cst_128 = arith.constant 1.000000e+00 : f32
    %343 = vector.broadcast %cst_128 : f32 to vector<16x1xf32>
    %344 = arith.addf %342, %343 : vector<16x1xf32>
    %cst_129 = arith.constant 5.000000e-01 : f32
    %345 = vector.broadcast %cst_129 : f32 to vector<16x1xf32>
    %346 = arith.mulf %344, %345 : vector<16x1xf32>
    %347 = arith.mulf %332, %341 : vector<16x1xf32>
    %cst_130 = arith.constant 1.000000e+00 : f32
    %348 = vector.broadcast %cst_130 : f32 to vector<16x1xf32>
    %349 = arith.addf %347, %348 : vector<16x1xf32>
    %cst_131 = arith.constant 5.000000e-01 : f32
    %350 = vector.broadcast %cst_131 : f32 to vector<16x1xf32>
    %351 = arith.mulf %349, %350 : vector<16x1xf32>
    %352 = arith.mulf %333, %341 : vector<16x1xf32>
    %cst_132 = arith.constant 1.000000e+00 : f32
    %353 = vector.broadcast %cst_132 : f32 to vector<16x1xf32>
    %354 = arith.addf %352, %353 : vector<16x1xf32>
    %cst_133 = arith.constant 5.000000e-01 : f32
    %355 = vector.broadcast %cst_133 : f32 to vector<16x1xf32>
    %356 = arith.mulf %354, %355 : vector<16x1xf32>
    %357 = vector.broadcast %346 : vector<16x1xf32> to vector<16x128xf32>
    %358 = vector.broadcast %6 : vector<1x128xf32> to vector<16x128xf32>
    %359 = arith.mulf %357, %358 : vector<16x128xf32>
    %360 = vector.broadcast %351 : vector<16x1xf32> to vector<16x128xf32>
    %361 = vector.broadcast %7 : vector<1x128xf32> to vector<16x128xf32>
    %362 = arith.mulf %360, %361 : vector<16x128xf32>
    %363 = arith.addf %359, %362 : vector<16x128xf32>
    %364 = vector.broadcast %356 : vector<16x1xf32> to vector<16x128xf32>
    %365 = vector.broadcast %8 : vector<1x128xf32> to vector<16x128xf32>
    %366 = arith.mulf %364, %365 : vector<16x128xf32>
    %367 = arith.addf %363, %366 : vector<16x128xf32>
    %368 = vector.broadcast %9 : vector<1x128xf32> to vector<16x128xf32>
    %369 = arith.addf %367, %368 : vector<16x128xf32>
    %cst_134 = arith.constant 0.000000e+00 : f32
    %370 = vector.broadcast %cst_134 : f32 to vector<16x128xf32>
    %371 = arith.maximumf %369, %370 : vector<16x128xf32>
    %372 = vector.broadcast %4 : vector<1x128xf32> to vector<16x128xf32>
    %373 = arith.mulf %328, %372 : vector<16x128xf32>
    %374 = vector.broadcast %5 : vector<1x128xf32> to vector<16x128xf32>
    %375 = arith.addf %373, %374 : vector<16x128xf32>
    %cst_135 = arith.constant 0.000000e+00 : f32
    %376 = vector.broadcast %cst_135 : f32 to vector<16x128xf32>
    %377 = arith.maximumf %375, %376 : vector<16x128xf32>
    %378 = arith.mulf %377, %371 : vector<16x128xf32>
    %379 = arith.maximumf %326, %378 : vector<16x128xf32>
    %c0_i32_136 = arith.constant 0 : i32
    %c16_i32_137 = arith.constant 16 : i32
    %380 = arith.addi %c0_i32_136, %c16_i32_137 : i32
    %c1_i32_138 = arith.constant 1 : i32
    scf.for %arg10 = %c0_i32_136 to %380 step %c1_i32_138  : i32 {
      %c8_i32_157 = arith.constant 8 : i32
      %436 = arith.muli %arg10, %c8_i32_157 : i32
      %437 = arith.addi %3, %436 : i32
      %c7_i32 = arith.constant 7 : i32
      %438 = arith.addi %437, %c7_i32 : i32
      %439 = arith.index_cast %438 : i32 to index
      %440 = memref.load %arg2[%439] : memref<256xi32, #tpu.memory_space<smem>>
      %c0_158 = arith.constant 0 : index
      %441 = arith.index_cast %440 : i32 to index
      %c0_159 = arith.constant 0 : index
      %442 = vector.load %arg3[%c0_158, %441, %c0_159] : memref<1x16x128xf32, #tpu.memory_space<vmem>>, vector<1x1x128xf32>
      %443 = vector.shape_cast %442 : vector<1x1x128xf32> to vector<1x128xf32>
      %444 = arith.index_cast %arg10 : i32 to index
      %c0_160 = arith.constant 0 : index
      %445 = vector.load %arg9[%444, %c0_160] : memref<16x128xf32, #tpu.memory_space<vmem>>, vector<1x128xf32>
      tpu.vector_store %arg9[%444, %c0_160], %443 {strides = array<i32>} : memref<16x128xf32, #tpu.memory_space<vmem>>, vector<1x128xf32>,
    }
    %c16_i32_139 = arith.constant 16 : i32
    %c0_140 = arith.constant 0 : index
    %c0_141 = arith.constant 0 : index
    %381 = vector.load %arg9[%c0_140, %c0_141] : memref<16x128xf32, #tpu.memory_space<vmem>>, vector<16x128xf32>
    %c0_142 = arith.constant 0 : index
    %c7 = arith.constant 7 : index
    %c0_143 = arith.constant 0 : index
    %c0_144 = arith.constant 0 : index
    %382 = vector.load %arg4[%c0_142, %c7, %c0_143, %c0_144] : memref<1x8x16x3xf32, #tpu.memory_space<vmem>>, vector<1x1x16x3xf32>
    %383 = vector.shape_cast %382 : vector<1x1x16x3xf32> to vector<16x3xf32>
    %384 = vector.extract_strided_slice %383 {offsets = [0, 0], sizes = [16, 1], strides = [1, 1]} : vector<16x3xf32> to vector<16x1xf32>
    %385 = vector.extract_strided_slice %383 {offsets = [0, 1], sizes = [16, 1], strides = [1, 1]} : vector<16x3xf32> to vector<16x1xf32>
    %386 = vector.extract_strided_slice %383 {offsets = [0, 2], sizes = [16, 1], strides = [1, 1]} : vector<16x3xf32> to vector<16x1xf32>
    %387 = arith.mulf %384, %384 : vector<16x1xf32>
    %388 = arith.mulf %385, %385 : vector<16x1xf32>
    %389 = arith.addf %387, %388 : vector<16x1xf32>
    %390 = arith.mulf %386, %386 : vector<16x1xf32>
    %391 = arith.addf %389, %390 : vector<16x1xf32>
    %cst_145 = arith.constant 1.000000e-24 : f32
    %392 = vector.broadcast %cst_145 : f32 to vector<16x1xf32>
    %393 = arith.maximumf %391, %392 : vector<16x1xf32>
    %394 = math.rsqrt %393 : vector<16x1xf32>
    %395 = arith.mulf %384, %394 : vector<16x1xf32>
    %cst_146 = arith.constant 1.000000e+00 : f32
    %396 = vector.broadcast %cst_146 : f32 to vector<16x1xf32>
    %397 = arith.addf %395, %396 : vector<16x1xf32>
    %cst_147 = arith.constant 5.000000e-01 : f32
    %398 = vector.broadcast %cst_147 : f32 to vector<16x1xf32>
    %399 = arith.mulf %397, %398 : vector<16x1xf32>
    %400 = arith.mulf %385, %394 : vector<16x1xf32>
    %cst_148 = arith.constant 1.000000e+00 : f32
    %401 = vector.broadcast %cst_148 : f32 to vector<16x1xf32>
    %402 = arith.addf %400, %401 : vector<16x1xf32>
    %cst_149 = arith.constant 5.000000e-01 : f32
    %403 = vector.broadcast %cst_149 : f32 to vector<16x1xf32>
    %404 = arith.mulf %402, %403 : vector<16x1xf32>
    %405 = arith.mulf %386, %394 : vector<16x1xf32>
    %cst_150 = arith.constant 1.000000e+00 : f32
    %406 = vector.broadcast %cst_150 : f32 to vector<16x1xf32>
    %407 = arith.addf %405, %406 : vector<16x1xf32>
    %cst_151 = arith.constant 5.000000e-01 : f32
    %408 = vector.broadcast %cst_151 : f32 to vector<16x1xf32>
    %409 = arith.mulf %407, %408 : vector<16x1xf32>
    %410 = vector.broadcast %399 : vector<16x1xf32> to vector<16x128xf32>
    %411 = vector.broadcast %6 : vector<1x128xf32> to vector<16x128xf32>
    %412 = arith.mulf %410, %411 : vector<16x128xf32>
    %413 = vector.broadcast %404 : vector<16x1xf32> to vector<16x128xf32>
    %414 = vector.broadcast %7 : vector<1x128xf32> to vector<16x128xf32>
    %415 = arith.mulf %413, %414 : vector<16x128xf32>
    %416 = arith.addf %412, %415 : vector<16x128xf32>
    %417 = vector.broadcast %409 : vector<16x1xf32> to vector<16x128xf32>
    %418 = vector.broadcast %8 : vector<1x128xf32> to vector<16x128xf32>
    %419 = arith.mulf %417, %418 : vector<16x128xf32>
    %420 = arith.addf %416, %419 : vector<16x128xf32>
    %421 = vector.broadcast %9 : vector<1x128xf32> to vector<16x128xf32>
    %422 = arith.addf %420, %421 : vector<16x128xf32>
    %cst_152 = arith.constant 0.000000e+00 : f32
    %423 = vector.broadcast %cst_152 : f32 to vector<16x128xf32>
    %424 = arith.maximumf %422, %423 : vector<16x128xf32>
    %425 = vector.broadcast %4 : vector<1x128xf32> to vector<16x128xf32>
    %426 = arith.mulf %381, %425 : vector<16x128xf32>
    %427 = vector.broadcast %5 : vector<1x128xf32> to vector<16x128xf32>
    %428 = arith.addf %426, %427 : vector<16x128xf32>
    %cst_153 = arith.constant 0.000000e+00 : f32
    %429 = vector.broadcast %cst_153 : f32 to vector<16x128xf32>
    %430 = arith.maximumf %428, %429 : vector<16x128xf32>
    %431 = arith.mulf %430, %424 : vector<16x128xf32>
    %432 = arith.maximumf %379, %431 : vector<16x128xf32>
    %c0_154 = arith.constant 0 : index
    %c0_155 = arith.constant 0 : index
    %c0_156 = arith.constant 0 : index
    %433 = vector.load %arg8[%c0_154, %c0_155, %c0_156] : memref<1x16x128xf32, #tpu.memory_space<vmem>>, vector<1x16x128xf32>
    %434 = vector.shape_cast %433 : vector<1x16x128xf32> to vector<16x128xf32>
    %435 = vector.shape_cast %432 : vector<16x128xf32> to vector<1x16x128xf32>
    tpu.vector_store %arg8[%c0_154, %c0_155, %c0_156], %435 {strides = array<i32>} : memref<1x16x128xf32, #tpu.memory_space<vmem>>, vector<1x16x128xf32>,
    return
  }
  func.func @transform_0(%arg0: i32, %arg1: i32, %arg2: memref<256xi32, #tpu.memory_space<smem>>) -> (i32, i32, i32) {
    %c0_i32 = arith.constant 0 : i32
    %c0_i32_0 = arith.constant 0 : i32
    %c0_i32_1 = arith.constant 0 : i32
    return %arg0, %c0_i32, %c0_i32_0 : i32, i32, i32
  }
  func.func @transform_1(%arg0: i32, %arg1: i32, %arg2: memref<256xi32, #tpu.memory_space<smem>>) -> (i32, i32, i32, i32) {
    %c0_i32 = arith.constant 0 : i32
    %c0_i32_0 = arith.constant 0 : i32
    %c0_i32_1 = arith.constant 0 : i32
    return %arg0, %c0_i32, %arg1, %c0_i32_0 : i32, i32, i32, i32
  }
  func.func @transform_2(%arg0: i32, %arg1: i32, %arg2: memref<256xi32, #tpu.memory_space<smem>>) -> (i32, i32) {
    %c0_i32 = arith.constant 0 : i32
    %c0_i32_0 = arith.constant 0 : i32
    %c0_i32_1 = arith.constant 0 : i32
    return %c0_i32, %c0_i32_0 : i32, i32
  }
  func.func @transform_3(%arg0: i32, %arg1: i32, %arg2: memref<256xi32, #tpu.memory_space<smem>>) -> (i32, i32) {
    %c0_i32 = arith.constant 0 : i32
    %c0_i32_0 = arith.constant 0 : i32
    %c0_i32_1 = arith.constant 0 : i32
    return %c0_i32, %c0_i32_0 : i32, i32
  }
  func.func @transform_4(%arg0: i32, %arg1: i32, %arg2: memref<256xi32, #tpu.memory_space<smem>>) -> (i32, i32) {
    %c0_i32 = arith.constant 0 : i32
    %c0_i32_0 = arith.constant 0 : i32
    %c0_i32_1 = arith.constant 0 : i32
    return %c0_i32, %c0_i32_0 : i32, i32
  }
  func.func @transform_5(%arg0: i32, %arg1: i32, %arg2: memref<256xi32, #tpu.memory_space<smem>>) -> (i32, i32, i32) {
    %c0_i32 = arith.constant 0 : i32
    %c0_i32_0 = arith.constant 0 : i32
    return %arg0, %arg1, %c0_i32 : i32, i32, i32
  }
}

</mosaic_0001>

<llo_original>
// kernel: conv_layer_forward.1
$region0: #{conv_layer_forward.1}
  #allocation0 [shape = 'u32[]', space=smem, size = 0x4, offset = 0x4, fixed_abs, tag = 'smem constant byte address 0x4 - core index']
  #allocation1 [shape = 'u32[72,128]{1,0:T(1,128)}', space=vmem, size = 0x9000, scoped, tag = 'internal scratch']
  #allocation2 [shape = 'f32[16,128]{1,0:T(8,128)}', space=vmem, size = 0x2000, scoped, tag = 'scratch operand']
  #allocation3 [shape = 's32[1]{0}', space=sflag, size = 0x4, scoped, tag = 'scoped memory for conv_layer_forward.1']
  #allocation4 [shape = 'u8[1024]{0}', space=smem, size = 0x400, scoped, tag = 'prefetched SMEM operand 0']
  %s0 = inlined_call_operand.vmem [shape: s32[256], index: 0, kind: input, shape index: {}]
  %s1 = inlined_call_operand.vmem [shape: f32[2,16,128], index: 1, kind: input, shape index: {}]
  %s2 = inlined_call_operand.vmem [shape: f32[2,8,16,3], index: 2, kind: input, shape index: {}]
  %s3 = inlined_call_operand.vmem [shape: f32[4,128], index: 3, kind: input, shape index: {}]
  %s4 = inlined_call_operand.vmem [shape: f32[1,128], index: 4, kind: input, shape index: {}]
  %s5 = inlined_call_operand.vmem [shape: f32[1,128], index: 5, kind: input, shape index: {}]
  %s6 = inlined_call_operand.hbm [shape: f32[2,16,128], index: 6, kind: output, shape index: {}]
  %s7 = sld [smem:[#allocation0]]
  $region109: #{conv_layer_forward.1} parent=0
    _
  %s9 = ssub.s32 1, %s7
  %s10 = scalar_select 0, %s9, %s7
  %s12 = sshll.u32 %s0, 4
  %s13 = int_to_ptr.vmem [resolvable:$true] %s12
  %15 = dma.vmem_to_smem %s13, 32, [#allocation4], [#allocation3]
  %17 = dma.done [#allocation3], 32
  %18 = sfence
  $region1: #{conv_layer_forward.1} parent=0
    #allocation5 [shape = 'u8[16384]{0}', space=vmem, size = 0x4000, scoped, tag = 'output window, operand 0']
    #allocation6 [shape = 's32[2]{0}', space=sflag, size = 0x8, scoped, tag = 'scoped memory for conv_layer_forward.1']
    %19 = vsyncpa [#allocation6], 0
    %s20 = scalar_lea.sflag [#allocation6], 1
    %21 = vsyncpa %s20, 0
    loop: start=0, step=1, limit=4
    $region2: #{conv_layer_forward.1} parent=1 // loop_pre_header
      _
    $region3: #{conv_layer_forward.1} parent=1 // loop_header
      %s23 = sphi 0, %s27
      %p24 = scmp.ge.s32.totalorder %s23, 4
      %s30 = sphi 0, %s42
      %s31 = sphi 0, %s38
      %s32 = sphi 0, %s30
      %s33 = sphi 0, %s31
      %s34 = sphi 0, %s32
      %s35 = sphi 0, %s33
      %s45 = sphi 0, %s47
      %s48 = sphi 0, %s45
      %s49 = sphi 0, %s48
      %s65 = sphi 0, %s49
      %s73 = sphi 0, %s75
      %s76 = sphi 0, %s73
      %s77 = sphi 0, %s76
      %s93 = sphi 0, %s77
      %s97 = sphi 0, %s97
      %s99 = sphi 0, %s97
      %s100 = sphi 0, %s99
      %s114 = sphi 0, %s100
      %s118 = sphi 0, %s118
      %s120 = sphi 0, %s118
      %s121 = sphi 0, %s120
      %s135 = sphi 0, %s121
      %s139 = sphi 0, %s139
      %s141 = sphi 0, %s139
      %s142 = sphi 0, %s141
      %s156 = sphi 0, %s142
      %s164 = sphi 0, %s166
      %s167 = sphi 0, %s164
      %s168 = sphi 0, %s167
      %s184 = sphi 0, %s168
    $region4: #{conv_layer_forward.1} parent=1 // loop_header_branch
      %26 = sbr.rel (%p24) target = $region8
    $region5: #{conv_layer_forward.1} parent=1 // loop_body
      %s28 = ssub.s32 %s23, 1
      %s29 = ssub.s32 %s23, 2
      %s36 = sadd.s32 1, %s31
      %p37 = scmp.ge.s32.totalorder %s36, 1
      %s38 = scalar_select %p37, 0, %s36
      %s39 = sadd.s32 1, %s30
      %s40 = scalar_select %p37, %s39, %s30
      %p41 = scmp.ge.s32.totalorder %s40, 2
      %s42 = scalar_select %p41, 0, %s40
      %s43 = ssub.s32 %s30, %s42
      %p44 = scmp.eq.s32.totalorder %s43, 0
      %s46 = sadd.s32 %s45, 1
      %s47 = scalar_select %p44, %s45, %s46
      %p50 = pneg %p44
      %p51 = scmp.eq.s32.totalorder %s23, 1
      %p52 = por %p50, %p51
      %p53 = scmp.ne.s32.totalorder %s45, %s48
      %p54 = scmp.eq.s32.totalorder %s23, 0
      %p55 = por %p53, %p54
      %p56 = scmp.ne.s32.totalorder %s45, %s48
      %p57 = scmp.eq.s32.totalorder %s28, 1
      %p58 = por %p56, %p57
      %p59 = scmp.ne.s32.totalorder %s48, %s49
      %p60 = scmp.eq.s32.totalorder %s28, 0
      %p61 = por %p59, %p60
      %p62 = scmp.ne.s32.totalorder %s48, %s49
      %p63 = scmp.eq.s32.totalorder %s29, 1
      %p64 = por %p62, %p63
      %p66 = scmp.ne.s32.totalorder %s49, %s65
      %p67 = scmp.eq.s32.totalorder %s29, 0
      %p68 = por %p66, %p67
      %s69 = ssub.s32 %s30, %s42
      %s70 = ssub.s32 %s31, %s38
      %s71 = sor.u32 %s69, %s70
      %p72 = scmp.eq.s32.totalorder %s71, 0
      %s74 = sadd.s32 %s73, 1
      %s75 = scalar_select %p72, %s73, %s74
      %p78 = pneg %p72
      %p79 = scmp.eq.s32.totalorder %s23, 1
      %p80 = por %p78, %p79
      %p81 = scmp.ne.s32.totalorder %s73, %s76
      %p82 = scmp.eq.s32.totalorder %s23, 0
      %p83 = por %p81, %p82
      %p84 = scmp.ne.s32.totalorder %s73, %s76
      %p85 = scmp.eq.s32.totalorder %s28, 1
      %p86 = por %p84, %p85
      %p87 = scmp.ne.s32.totalorder %s76, %s77
      %p88 = scmp.eq.s32.totalorder %s28, 0
      %p89 = por %p87, %p88
      %p90 = scmp.ne.s32.totalorder %s76, %s77
      %p91 = scmp.eq.s32.totalorder %s29, 1
      %p92 = por %p90, %p91
      %p94 = scmp.ne.s32.totalorder %s77, %s93
      %p95 = scmp.eq.s32.totalorder %s29, 0
      %p96 = por %p94, %p95
      %s98 = sadd.s32 %s97, 1
      %p101 = scmp.eq.s32.totalorder %s23, 1
      %p102 = scmp.ne.s32.totalorder %s97, %s99
      %p103 = scmp.eq.s32.totalorder %s23, 0
      %p104 = por %p102, %p103
      %p105 = scmp.ne.s32.totalorder %s97, %s99
      %p106 = scmp.eq.s32.totalorder %s28, 1
      %p107 = por %p105, %p106
      %p108 = scmp.ne.s32.totalorder %s99, %s100
      %p109 = scmp.eq.s32.totalorder %s28, 0
      %p110 = por %p108, %p109
      %p111 = scmp.ne.s32.totalorder %s99, %s100
      %p112 = scmp.eq.s32.totalorder %s29, 1
      %p113 = por %p111, %p112
      %p115 = scmp.ne.s32.totalorder %s100, %s114
      %p116 = scmp.eq.s32.totalorder %s29, 0
      %p117 = por %p115, %p116
      %s119 = sadd.s32 %s118, 1
      %p122 = scmp.eq.s32.totalorder %s23, 1
      %p123 = scmp.ne.s32.totalorder %s118, %s120
      %p124 = scmp.eq.s32.totalorder %s23, 0
      %p125 = por %p123, %p124
      %p126 = scmp.ne.s32.totalorder %s118, %s120
      %p127 = scmp.eq.s32.totalorder %s28, 1
      %p128 = por %p126, %p127
      %p129 = scmp.ne.s32.totalorder %s120, %s121
      %p130 = scmp.eq.s32.totalorder %s28, 0
      %p131 = por %p129, %p130
      %p132 = scmp.ne.s32.totalorder %s120, %s121
      %p133 = scmp.eq.s32.totalorder %s29, 1
      %p134 = por %p132, %p133
      %p136 = scmp.ne.s32.totalorder %s121, %s135
      %p137 = scmp.eq.s32.totalorder %s29, 0
      %p138 = por %p136, %p137
      %s140 = sadd.s32 %s139, 1
      %p143 = scmp.eq.s32.totalorder %s23, 1
      %p144 = scmp.ne.s32.totalorder %s139, %s141
      %p145 = scmp.eq.s32.totalorder %s23, 0
      %p146 = por %p144, %p145
      %p147 = scmp.ne.s32.totalorder %s139, %s141
      %p148 = scmp.eq.s32.totalorder %s28, 1
      %p149 = por %p147, %p148
      %p150 = scmp.ne.s32.totalorder %s141, %s142
      %p151 = scmp.eq.s32.totalorder %s28, 0
      %p152 = por %p150, %p151
      %p153 = scmp.ne.s32.totalorder %s141, %s142
      %p154 = scmp.eq.s32.totalorder %s29, 1
      %p155 = por %p153, %p154
      %p157 = scmp.ne.s32.totalorder %s142, %s156
      %p158 = scmp.eq.s32.totalorder %s29, 0
      %p159 = por %p157, %p158
      %s160 = ssub.s32 %s30, %s42
      %s161 = ssub.s32 %s31, %s38
      %s162 = sor.u32 %s160, %s161
      %p163 = scmp.eq.s32.totalorder %s162, 0
      %s165 = sadd.s32 %s164, 1
      %s166 = scalar_select %p163, %s164, %s165
      %p169 = pneg %p163
      %p170 = scmp.eq.s32.totalorder %s23, 1
      %p171 = por %p169, %p170
      %p172 = scmp.ne.s32.totalorder %s164, %s167
      %p173 = scmp.eq.s32.totalorder %s23, 0
      %p174 = por %p172, %p173
      %p175 = scmp.ne.s32.totalorder %s164, %s167
      %p176 = scmp.eq.s32.totalorder %s28, 1
      %p177 = por %p175, %p176
      %p178 = scmp.ne.s32.totalorder %s167, %s168
      %p179 = scmp.eq.s32.totalorder %s28, 0
      %p180 = por %p178, %p179
      %p181 = scmp.ne.s32.totalorder %s167, %s168
      %p182 = scmp.eq.s32.totalorder %s29, 1
      %p183 = por %p181, %p182
      %p185 = scmp.ne.s32.totalorder %s168, %s184
      %p186 = scmp.eq.s32.totalorder %s29, 0
      %p187 = por %p185, %p186
      %p188 = scmp.le.s32.totalorder 1, %s23
      %p189 = scmp.lt.s32.totalorder %s23, 3
      %p190 = pnand %p188, %p189
      %p191 = pneg %p190
      // Predicated region
      $region9: #{conv_layer_forward.1} parent=5 // pred_check
        _
      $region10: #{conv_layer_forward.1} parent=5 // pred_check_branch
        %193 = sbr.rel (%p190) target = $region12
      $region11: #{conv_layer_forward.1} parent=5 // pred_region
        %s194 = ssub.s32 %s23, 1
        // Predicated region
        $region13: #{conv_layer_forward.1} parent=11 // pred_check
          %p195 = pneg %p110
        $region14: #{conv_layer_forward.1} parent=11 // pred_check_branch
          %197 = sbr.rel (%p195) target = $region16
        $region15: #{conv_layer_forward.1} parent=11 // pred_region
          _
        $region16: #{conv_layer_forward.1} parent=11 // pred_fallthru
          _
        // Predicated region
        $region17: #{conv_layer_forward.1} parent=11 // pred_check
          %p198 = pneg %p131
        $region18: #{conv_layer_forward.1} parent=11 // pred_check_branch
          %200 = sbr.rel (%p198) target = $region20
        $region19: #{conv_layer_forward.1} parent=11 // pred_region
          _
        $region20: #{conv_layer_forward.1} parent=11 // pred_fallthru
          _
        // Predicated region
        $region21: #{conv_layer_forward.1} parent=11 // pred_check
          %p201 = pneg %p152
        $region22: #{conv_layer_forward.1} parent=11 // pred_check_branch
          %203 = sbr.rel (%p201) target = $region24
        $region23: #{conv_layer_forward.1} parent=11 // pred_region
          _
        $region24: #{conv_layer_forward.1} parent=11 // pred_fallthru
          _
      $region12: #{conv_layer_forward.1} parent=5 // pred_fallthru
        _
      %p204 = scmp.lt.s32.totalorder %s23, 2
      // Predicated region
      $region25: #{conv_layer_forward.1} parent=5 // pred_check
        %p205 = pneg %p204
      $region26: #{conv_layer_forward.1} parent=5 // pred_check_branch
        %207 = sbr.rel (%p205) target = $region28
      $region27: #{conv_layer_forward.1} parent=5 // pred_region
        // Predicated region
        $region29: #{conv_layer_forward.1} parent=27 // pred_check
          %p208 = pneg %p55
        $region30: #{conv_layer_forward.1} parent=27 // pred_check_branch
          %210 = sbr.rel (%p208) target = $region32
        $region31: #{conv_layer_forward.1} parent=27 // pred_region
          %p211 = scmp.lt.s32.totalorder %s30, 1
          %s212 = scalar_select %p211, %s30, 1
          %s213 = smul.addr %s212, 2
          %s214 = smul.addr %s213, 8
          %s215 = scalar_lea.vmem %s1, %s214
        $region32: #{conv_layer_forward.1} parent=27 // pred_fallthru
          _
        // Predicated region
        $region33: #{conv_layer_forward.1} parent=27 // pred_check
          %p216 = pneg %p83
        $region34: #{conv_layer_forward.1} parent=27 // pred_check_branch
          %218 = sbr.rel (%p216) target = $region36
        $region35: #{conv_layer_forward.1} parent=27 // pred_region
          %s219 = smul.u32 2, %s31
          %p220 = scmp.lt.s32.totalorder %s30, 1
          %s221 = scalar_select %p220, %s30, 1
          %p222 = scmp.lt.s32.totalorder %s219, 1
          %s223 = scalar_select %p222, %s219, 1
          %s224 = smul.addr %s221, 16
          %s225 = sadd.s32 %s223, %s224
          %s226 = smul.addr %s225, 8
          %s227 = scalar_lea.vmem %s2, %s226
          %s228 = smul.u32 2, %s31
        $region36: #{conv_layer_forward.1} parent=27 // pred_fallthru
          _
      $region28: #{conv_layer_forward.1} parent=5 // pred_fallthru
        _
      %p229 = scmp.le.s32.totalorder 1, %s23
      %p230 = scmp.lt.s32.totalorder %s23, 3
      %p231 = pnand %p229, %p230
      %p232 = pneg %p231
      // Predicated region
      $region37: #{conv_layer_forward.1} parent=5 // pred_check
        _
      $region38: #{conv_layer_forward.1} parent=5 // pred_check_branch
        %234 = sbr.rel (%p231) target = $region40
      $region39: #{conv_layer_forward.1} parent=5 // pred_region
        %s235 = ssub.s32 %s23, 1
        %p236 = scmp.lt.s32.totalorder %s32, 1
        %s237 = scalar_select %p236, %s32, 1
        %s238 = smul.addr %s237, 2
        %s239 = smul.addr %s238, 8
        %s240 = scalar_lea.vmem %s1, %s239
        %p241 = pneg %p61
        %p242 = pneg %p58
        %s243 = smul.u32 2, %s33
        %p244 = scmp.lt.s32.totalorder %s32, 1
        %s245 = scalar_select %p244, %s32, 1
        %p246 = scmp.lt.s32.totalorder %s243, 1
        %s247 = scalar_select %p246, %s243, 1
        %s248 = smul.addr %s245, 16
        %s249 = sadd.s32 %s247, %s248
        %s250 = smul.addr %s249, 8
        %s251 = scalar_lea.vmem %s2, %s250
        %p252 = pneg %p89
        %p253 = pneg %p86
        %p254 = pneg %p110
        %p255 = pneg %p107
        %p256 = pneg %p131
        %p257 = pneg %p128
        %p258 = pneg %p152
        %p259 = pneg %p149
        %p260 = pneg %p180
        %p261 = pneg %p177
        %s262 = sand.u32 %s167, 1
        %s263 = scalar_lea.sflag [#allocation6], %s262
        %s264 = sand.u32 %s167, 1
        %s265 = smul.addr %s264, 16
        %s266 = scalar_lea.vmem [#allocation5], %s265
        %p267 = scmp.lt.s32.totalorder %s32, 1
        %s268 = scalar_select %p267, %s32, 1
        %s269 = smul.addr %s268, 2
        %s270 = smul.addr %s269, 8
        %s271 = scalar_lea.vmem %s1, %s270
        %s272 = smul.u32 2, %s33
        %p273 = scmp.lt.s32.totalorder %s32, 1
        %s274 = scalar_select %p273, %s32, 1
        %p275 = scmp.lt.s32.totalorder %s272, 1
        %s276 = scalar_select %p275, %s272, 1
        %s277 = smul.addr %s274, 16
        %s278 = sadd.s32 %s276, %s277
        %s279 = smul.addr %s278, 8
        %s280 = scalar_lea.vmem %s2, %s279
        %s281 = smul.u32 2, %s33
        %s282 = smul.u32 2, %s33
        %s283 = smul.u32 %s32, 16
        %s284 = smul.u32 %s33, 16
        %s285 = sadd.s32 %s283, %s284
        %s286 = smul.u32 %s285, 8
        %v287 = vld [vmem:[%s4] sm:$0x1]
        %v288 = vld [vmem:[%s5] sm:$0x1]
        %v289 = vld [vmem:[%s3] sm:$0x1]
        %v290 = vld [vmem:[%s3 + $0x1] sm:$0x1]
        %v291 = vld [vmem:[%s3 + $0x2] sm:$0x1]
        %v292 = vld [vmem:[%s3 + $0x3] sm:$0x1]
        loop: start=0, step=1, limit=16
        $region41: #{conv_layer_forward.1} parent=39 // loop_pre_header
          _
        $region42: #{conv_layer_forward.1} parent=39 // loop_header
          %s294 = sphi 0, %s298
          %p295 = scmp.ge.s32.totalorder %s294, 16
        $region43: #{conv_layer_forward.1} parent=39 // loop_header_branch
          %297 = sbr.rel (%p295) target = $region47
        $region44: #{conv_layer_forward.1} parent=39 // loop_body
          %s299 = smul.u32 %s294, 8
          %s300 = sadd.s32 %s286, %s299
          %s301 = sld [smem:[#allocation4 + %s300]]
          %s302 = scalar_lea.vmem %s271, %s301
          %v303 = vld [vmem:[%s302] sm:$0x1]
          %s304 = scalar_lea.vmem [#allocation2], %s294
          %305 = vst [vmem:[%s304] sm:$0x1] %v303
        $region45: #{conv_layer_forward.1} parent=39 // loop_footer
          %s298 = sadd.s32 1, %s294
        $region46: #{conv_layer_forward.1} parent=39 // loop_footer_branch
          %293 = sbr.rel target = $region42
        $region47: #{conv_layer_forward.1} parent=39 // loop_exit
          _
        %v306 = vld [vmem:[#allocation2] sm:$0xff]
        %v307 = vld [vmem:[#allocation2 + $0x8] sm:$0xff]
        %v308 = vld [vmem:[%s280] sm:$0xff]
        %v309 = vld [vmem:[%s280 + $0x8] sm:$0xff]
        %v310 = vmul.f32 %v308, %v308
        %v311 = vmul.f32 %v309, %v309
        %314 = vrot.lane.b32.xlu0 %v310, 127
        %v315 = vpop.permute.xlu0 %314
        %316 = vrot.lane.b32.xlu0 %v311, 127
        %v317 = vpop.permute.xlu0 %316
        %v320 = vadd.f32 %v310, %v315
        %v321 = vadd.f32 %v311, %v317
        %322 = vrot.lane.b32.xlu0 %v310, 126
        %v323 = vpop.permute.xlu0 %322
        %324 = vrot.lane.b32.xlu0 %v311, 126
        %v325 = vpop.permute.xlu0 %324
        %v328 = vadd.f32 %v320, %v323
        %v329 = vadd.f32 %v321, %v325
        %v330 = vmax.f32 %v328, 1e-24
        %v331 = vmax.f32 %v329, 1e-24
        %v332 = vrsqrt.pop %v330
        %v333 = vmul.f32 %v332, %v330
        %v334 = vmul.f32 %v333, %v332
        %v335 = vmul.f32 0.5, %v334
        %v336 = vsub.f32 1.5, %v335
        %v337 = vmul.f32 %v332, %v336
        %vm338 = vweird.f32 %v330
        %vm339 = vweird.f32 %v332
        %vm340 = vmor %vm338, %vm339
        %v341 = vsel %vm340, %v332, %v337
        %v342 = vrsqrt.pop %v331
        %v343 = vmul.f32 %v342, %v331
        %v344 = vmul.f32 %v343, %v342
        %v345 = vmul.f32 0.5, %v344
        %v346 = vsub.f32 1.5, %v345
        %v347 = vmul.f32 %v342, %v346
        %vm348 = vweird.f32 %v331
        %vm349 = vweird.f32 %v342
        %vm350 = vmor %vm348, %vm349
        %v351 = vsel %vm350, %v342, %v347
        %v352 = vmul.f32 %v308, %v341
        %v353 = vmul.f32 %v309, %v351
        %v354 = vadd.f32 %v352, 1.0
        %v355 = vadd.f32 %v353, 1.0
        %v356 = vmul.f32 %v354, 0.5
        %v357 = vmul.f32 %v355, 0.5
        %360 = vrot.lane.b32.xlu0 %v341, 1
        %v361 = vpop.permute.xlu0 %360
        %362 = vrot.lane.b32.xlu0 %v351, 1
        %v363 = vpop.permute.xlu0 %362
        %v366 = vmul.f32 %v308, %v361
        %v367 = vmul.f32 %v309, %v363
        %v368 = vadd.f32 %v366, 1.0
        %v369 = vadd.f32 %v367, 1.0
        %v370 = vmul.f32 %v368, 0.5
        %v371 = vmul.f32 %v369, 0.5
        %372 = vrot.lane.b32.xlu0 %v341, 2
        %v373 = vpop.permute.xlu0 %372
        %374 = vrot.lane.b32.xlu0 %v351, 2
        %v375 = vpop.permute.xlu0 %374
        %v378 = vmul.f32 %v308, %v373
        %v379 = vmul.f32 %v309, %v375
        %v380 = vadd.f32 %v378, 1.0
        %v381 = vadd.f32 %v379, 1.0
        %v382 = vmul.f32 %v380, 0.5
        %v383 = vmul.f32 %v381, 0.5
        %385 = vset.pattern.permute.xlu0 0
        %386 = vperm.xlu0 %385, %v356
        %v387 = vpop.permute.xlu0 %386
        %390 = vset.pattern.permute.xlu0 0
        %391 = vperm.xlu0 %390, %v357
        %v392 = vpop.permute.xlu0 %391
        %v394 = vperm.slane %v289, 0
        %v395 = vmul.f32 %v387, %v394
        %v396 = vmul.f32 %v392, %v394
        %398 = vset.pattern.permute.xlu0 1
        %399 = vperm.xlu0 %398, %v370
        %v400 = vpop.permute.xlu0 %399
        %403 = vset.pattern.permute.xlu0 1
        %404 = vperm.xlu0 %403, %v371
        %v405 = vpop.permute.xlu0 %404
        %v407 = vperm.slane %v290, 0
        %v408 = vmul.f32 %v400, %v407
        %v409 = vmul.f32 %v405, %v407
        %v410 = vadd.f32 %v395, %v408
        %v411 = vadd.f32 %v396, %v409
        %413 = vset.pattern.permute.xlu0 2
        %414 = vperm.xlu0 %413, %v382
        %v415 = vpop.permute.xlu0 %414
        %418 = vset.pattern.permute.xlu0 2
        %419 = vperm.xlu0 %418, %v383
        %v420 = vpop.permute.xlu0 %419
        %v422 = vperm.slane %v291, 0
        %v423 = vmul.f32 %v415, %v422
        %v424 = vmul.f32 %v420, %v422
        %v425 = vadd.f32 %v410, %v423
        %v426 = vadd.f32 %v411, %v424
        %v427 = vperm.slane %v292, 0
        %v428 = vadd.f32 %v425, %v427
        %v429 = vadd.f32 %v426, %v427
        %v430 = vmax.f32 %v428, 0.0
        %v431 = vmax.f32 %v429, 0.0
        %v433 = vperm.slane %v287, 0
        %v435 = vmul.f32 %v306, %v433
        %v436 = vmul.f32 %v307, %v433
        %v438 = vperm.slane %v288, 0
        %v440 = vadd.f32 %v435, %v438
        %v441 = vadd.f32 %v436, %v438
        %v442 = vmax.f32 %v440, 0.0
        %v443 = vmax.f32 %v441, 0.0
        %v444 = vmul.f32 %v442, %v430
        %v445 = vmul.f32 %v443, %v431
        loop: start=0, step=1, limit=16
        $region48: #{conv_layer_forward.1} parent=39 // loop_pre_header
          _
        $region49: #{conv_layer_forward.1} parent=39 // loop_header
          %s447 = sphi 0, %s451
          %p448 = scmp.ge.s32.totalorder %s447, 16
        $region50: #{conv_layer_forward.1} parent=39 // loop_header_branch
          %450 = sbr.rel (%p448) target = $region54
        $region51: #{conv_layer_forward.1} parent=39 // loop_body
          %s452 = smul.u32 %s447, 8
          %s453 = sadd.s32 %s286, %s452
          %s454 = sadd.s32 %s453, 1
          %s455 = sld [smem:[#allocation4 + %s454]]
          %s456 = scalar_lea.vmem %s271, %s455
          %v457 = vld [vmem:[%s456] sm:$0x1]
          %s458 = scalar_lea.vmem [#allocation2], %s447
          %459 = vst [vmem:[%s458] sm:$0x1] %v457
        $region52: #{conv_layer_forward.1} parent=39 // loop_footer
          %s451 = sadd.s32 1, %s447
        $region53: #{conv_layer_forward.1} parent=39 // loop_footer_branch
          %446 = sbr.rel target = $region49
        $region54: #{conv_layer_forward.1} parent=39 // loop_exit
          _
        %v460 = vld [vmem:[#allocation2] sm:$0xff]
        %v461 = vld [vmem:[#allocation2 + $0x8] sm:$0xff]
        %s462 = scalar_lea.vmem %s280, 16
        %v463 = vld [vmem:[%s462] sm:$0xff]
        %v464 = vld [vmem:[%s462 + $0x8] sm:$0xff]
        %v465 = vmul.f32 %v463, %v463
        %v466 = vmul.f32 %v464, %v464
        %469 = vrot.lane.b32.xlu0 %v465, 127
        %v470 = vpop.permute.xlu0 %469
        %471 = vrot.lane.b32.xlu0 %v466, 127
        %v472 = vpop.permute.xlu0 %471
        %v475 = vadd.f32 %v465, %v470
        %v476 = vadd.f32 %v466, %v472
        %477 = vrot.lane.b32.xlu0 %v465, 126
        %v478 = vpop.permute.xlu0 %477
        %479 = vrot.lane.b32.xlu0 %v466, 126
        %v480 = vpop.permute.xlu0 %479
        %v483 = vadd.f32 %v475, %v478
        %v484 = vadd.f32 %v476, %v480
        %v485 = vmax.f32 %v483, 1e-24
        %v486 = vmax.f32 %v484, 1e-24
        %v487 = vrsqrt.pop %v485
        %v488 = vmul.f32 %v487, %v485
        %v489 = vmul.f32 %v488, %v487
        %v490 = vmul.f32 0.5, %v489
        %v491 = vsub.f32 1.5, %v490
        %v492 = vmul.f32 %v487, %v491
        %vm493 = vweird.f32 %v485
        %vm494 = vweird.f32 %v487
        %vm495 = vmor %vm493, %vm494
        %v496 = vsel %vm495, %v487, %v492
        %v497 = vrsqrt.pop %v486
        %v498 = vmul.f32 %v497, %v486
        %v499 = vmul.f32 %v498, %v497
        %v500 = vmul.f32 0.5, %v499
        %v501 = vsub.f32 1.5, %v500
        %v502 = vmul.f32 %v497, %v501
        %vm503 = vweird.f32 %v486
        %vm504 = vweird.f32 %v497
        %vm505 = vmor %vm503, %vm504
        %v506 = vsel %vm505, %v497, %v502
        %v507 = vmul.f32 %v463, %v496
        %v508 = vmul.f32 %v464, %v506
        %v509 = vadd.f32 %v507, 1.0
        %v510 = vadd.f32 %v508, 1.0
        %v511 = vmul.f32 %v509, 0.5
        %v512 = vmul.f32 %v510, 0.5
        %515 = vrot.lane.b32.xlu0 %v496, 1
        %v516 = vpop.permute.xlu0 %515
        %517 = vrot.lane.b32.xlu0 %v506, 1
        %v518 = vpop.permute.xlu0 %517
        %v521 = vmul.f32 %v463, %v516
        %v522 = vmul.f32 %v464, %v518
        %v523 = vadd.f32 %v521, 1.0
        %v524 = vadd.f32 %v522, 1.0
        %v525 = vmul.f32 %v523, 0.5
        %v526 = vmul.f32 %v524, 0.5
        %527 = vrot.lane.b32.xlu0 %v496, 2
        %v528 = vpop.permute.xlu0 %527
        %529 = vrot.lane.b32.xlu0 %v506, 2
        %v530 = vpop.permute.xlu0 %529
        %v533 = vmul.f32 %v463, %v528
        %v534 = vmul.f32 %v464, %v530
        %v535 = vadd.f32 %v533, 1.0
        %v536 = vadd.f32 %v534, 1.0
        %v537 = vmul.f32 %v535, 0.5
        %v538 = vmul.f32 %v536, 0.5
        %540 = vset.pattern.permute.xlu0 0
        %541 = vperm.xlu0 %540, %v511
        %v542 = vpop.permute.xlu0 %541
        %545 = vset.pattern.permute.xlu0 0
        %546 = vperm.xlu0 %545, %v512
        %v547 = vpop.permute.xlu0 %546
        %v549 = vmul.f32 %v542, %v394
        %v550 = vmul.f32 %v547, %v394
        %552 = vset.pattern.permute.xlu0 1
        %553 = vperm.xlu0 %552, %v525
        %v554 = vpop.permute.xlu0 %553
        %557 = vset.pattern.permute.xlu0 1
        %558 = vperm.xlu0 %557, %v526
        %v559 = vpop.permute.xlu0 %558
        %v561 = vmul.f32 %v554, %v407
        %v562 = vmul.f32 %v559, %v407
        %v563 = vadd.f32 %v549, %v561
        %v564 = vadd.f32 %v550, %v562
        %566 = vset.pattern.permute.xlu0 2
        %567 = vperm.xlu0 %566, %v537
        %v568 = vpop.permute.xlu0 %567
        %571 = vset.pattern.permute.xlu0 2
        %572 = vperm.xlu0 %571, %v538
        %v573 = vpop.permute.xlu0 %572
        %v575 = vmul.f32 %v568, %v422
        %v576 = vmul.f32 %v573, %v422
        %v577 = vadd.f32 %v563, %v575
        %v578 = vadd.f32 %v564, %v576
        %v579 = vadd.f32 %v577, %v427
        %v580 = vadd.f32 %v578, %v427
        %v581 = vmax.f32 %v579, 0.0
        %v582 = vmax.f32 %v580, 0.0
        %v583 = vmul.f32 %v460, %v433
        %v584 = vmul.f32 %v461, %v433
        %v585 = vadd.f32 %v583, %v438
        %v586 = vadd.f32 %v584, %v438
        %v587 = vmax.f32 %v585, 0.0
        %v588 = vmax.f32 %v586, 0.0
        %v589 = vmul.f32 %v587, %v581
        %v590 = vmul.f32 %v588, %v582
        %v591 = vmax.f32 %v444, %v589
        %v592 = vmax.f32 %v445, %v590
        loop: start=0, step=1, limit=16
        $region55: #{conv_layer_forward.1} parent=39 // loop_pre_header
          _
        $region56: #{conv_layer_forward.1} parent=39 // loop_header
          %s594 = sphi 0, %s598
          %p595 = scmp.ge.s32.totalorder %s594, 16
        $region57: #{conv_layer_forward.1} parent=39 // loop_header_branch
          %597 = sbr.rel (%p595) target = $region61
        $region58: #{conv_layer_forward.1} parent=39 // loop_body
          %s599 = smul.u32 %s594, 8
          %s600 = sadd.s32 %s286, %s599
          %s601 = sadd.s32 %s600, 2
          %s602 = sld [smem:[#allocation4 + %s601]]
          %s603 = scalar_lea.vmem %s271, %s602
          %v604 = vld [vmem:[%s603] sm:$0x1]
          %s605 = scalar_lea.vmem [#allocation2], %s594
          %606 = vst [vmem:[%s605] sm:$0x1] %v604
        $region59: #{conv_layer_forward.1} parent=39 // loop_footer
          %s598 = sadd.s32 1, %s594
        $region60: #{conv_layer_forward.1} parent=39 // loop_footer_branch
          %593 = sbr.rel target = $region56
        $region61: #{conv_layer_forward.1} parent=39 // loop_exit
          _
        %v607 = vld [vmem:[#allocation2] sm:$0xff]
        %v608 = vld [vmem:[#allocation2 + $0x8] sm:$0xff]
        %s609 = scalar_lea.vmem %s280, 32
        %v610 = vld [vmem:[%s609] sm:$0xff]
        %v611 = vld [vmem:[%s609 + $0x8] sm:$0xff]
        %v612 = vmul.f32 %v610, %v610
        %v613 = vmul.f32 %v611, %v611
        %616 = vrot.lane.b32.xlu0 %v612, 127
        %v617 = vpop.permute.xlu0 %616
        %618 = vrot.lane.b32.xlu0 %v613, 127
        %v619 = vpop.permute.xlu0 %618
        %v622 = vadd.f32 %v612, %v617
        %v623 = vadd.f32 %v613, %v619
        %624 = vrot.lane.b32.xlu0 %v612, 126
        %v625 = vpop.permute.xlu0 %624
        %626 = vrot.lane.b32.xlu0 %v613, 126
        %v627 = vpop.permute.xlu0 %626
        %v630 = vadd.f32 %v622, %v625
        %v631 = vadd.f32 %v623, %v627
        %v632 = vmax.f32 %v630, 1e-24
        %v633 = vmax.f32 %v631, 1e-24
        %v634 = vrsqrt.pop %v632
        %v635 = vmul.f32 %v634, %v632
        %v636 = vmul.f32 %v635, %v634
        %v637 = vmul.f32 0.5, %v636
        %v638 = vsub.f32 1.5, %v637
        %v639 = vmul.f32 %v634, %v638
        %vm640 = vweird.f32 %v632
        %vm641 = vweird.f32 %v634
        %vm642 = vmor %vm640, %vm641
        %v643 = vsel %vm642, %v634, %v639
        %v644 = vrsqrt.pop %v633
        %v645 = vmul.f32 %v644, %v633
        %v646 = vmul.f32 %v645, %v644
        %v647 = vmul.f32 0.5, %v646
        %v648 = vsub.f32 1.5, %v647
        %v649 = vmul.f32 %v644, %v648
        %vm650 = vweird.f32 %v633
        %vm651 = vweird.f32 %v644
        %vm652 = vmor %vm650, %vm651
        %v653 = vsel %vm652, %v644, %v649
        %v654 = vmul.f32 %v610, %v643
        %v655 = vmul.f32 %v611, %v653
        %v656 = vadd.f32 %v654, 1.0
        %v657 = vadd.f32 %v655, 1.0
        %v658 = vmul.f32 %v656, 0.5
        %v659 = vmul.f32 %v657, 0.5
        %662 = vrot.lane.b32.xlu0 %v643, 1
        %v663 = vpop.permute.xlu0 %662
        %664 = vrot.lane.b32.xlu0 %v653, 1
        %v665 = vpop.permute.xlu0 %664
        %v668 = vmul.f32 %v610, %v663
        %v669 = vmul.f32 %v611, %v665
        %v670 = vadd.f32 %v668, 1.0
        %v671 = vadd.f32 %v669, 1.0
        %v672 = vmul.f32 %v670, 0.5
        %v673 = vmul.f32 %v671, 0.5
        %674 = vrot.lane.b32.xlu0 %v643, 2
        %v675 = vpop.permute.xlu0 %674
        %676 = vrot.lane.b32.xlu0 %v653, 2
        %v677 = vpop.permute.xlu0 %676
        %v680 = vmul.f32 %v610, %v675
        %v681 = vmul.f32 %v611, %v677
        %v682 = vadd.f32 %v680, 1.0
        %v683 = vadd.f32 %v681, 1.0
        %v684 = vmul.f32 %v682, 0.5
        %v685 = vmul.f32 %v683, 0.5
        %687 = vset.pattern.permute.xlu0 0
        %688 = vperm.xlu0 %687, %v658
        %v689 = vpop.permute.xlu0 %688
        %692 = vset.pattern.permute.xlu0 0
        %693 = vperm.xlu0 %692, %v659
        %v694 = vpop.permute.xlu0 %693
        %v696 = vmul.f32 %v689, %v394
        %v697 = vmul.f32 %v694, %v394
        %699 = vset.pattern.permute.xlu0 1
        %700 = vperm.xlu0 %699, %v672
        %v701 = vpop.permute.xlu0 %700
        %704 = vset.pattern.permute.xlu0 1
        %705 = vperm.xlu0 %704, %v673
        %v706 = vpop.permute.xlu0 %705
        %v708 = vmul.f32 %v701, %v407
        %v709 = vmul.f32 %v706, %v407
        %v710 = vadd.f32 %v696, %v708
        %v711 = vadd.f32 %v697, %v709
        %713 = vset.pattern.permute.xlu0 2
        %714 = vperm.xlu0 %713, %v684
        %v715 = vpop.permute.xlu0 %714
        %718 = vset.pattern.permute.xlu0 2
        %719 = vperm.xlu0 %718, %v685
        %v720 = vpop.permute.xlu0 %719
        %v722 = vmul.f32 %v715, %v422
        %v723 = vmul.f32 %v720, %v422
        %v724 = vadd.f32 %v710, %v722
        %v725 = vadd.f32 %v711, %v723
        %v726 = vadd.f32 %v724, %v427
        %v727 = vadd.f32 %v725, %v427
        %v728 = vmax.f32 %v726, 0.0
        %v729 = vmax.f32 %v727, 0.0
        %v730 = vmul.f32 %v607, %v433
        %v731 = vmul.f32 %v608, %v433
        %v732 = vadd.f32 %v730, %v438
        %v733 = vadd.f32 %v731, %v438
        %v734 = vmax.f32 %v732, 0.0
        %v735 = vmax.f32 %v733, 0.0
        %v736 = vmul.f32 %v734, %v728
        %v737 = vmul.f32 %v735, %v729
        %v738 = vmax.f32 %v591, %v736
        %v739 = vmax.f32 %v592, %v737
        loop: start=0, step=1, limit=16
        $region62: #{conv_layer_forward.1} parent=39 // loop_pre_header
          _
        $region63: #{conv_layer_forward.1} parent=39 // loop_header
          %s741 = sphi 0, %s745
          %p742 = scmp.ge.s32.totalorder %s741, 16
        $region64: #{conv_layer_forward.1} parent=39 // loop_header_branch
          %744 = sbr.rel (%p742) target = $region68
        $region65: #{conv_layer_forward.1} parent=39 // loop_body
          %s746 = smul.u32 %s741, 8
          %s747 = sadd.s32 %s286, %s746
          %s748 = sadd.s32 %s747, 3
          %s749 = sld [smem:[#allocation4 + %s748]]
          %s750 = scalar_lea.vmem %s271, %s749
          %v751 = vld [vmem:[%s750] sm:$0x1]
          %s752 = scalar_lea.vmem [#allocation2], %s741
          %753 = vst [vmem:[%s752] sm:$0x1] %v751
        $region66: #{conv_layer_forward.1} parent=39 // loop_footer
          %s745 = sadd.s32 1, %s741
        $region67: #{conv_layer_forward.1} parent=39 // loop_footer_branch
          %740 = sbr.rel target = $region63
        $region68: #{conv_layer_forward.1} parent=39 // loop_exit
          _
        %v754 = vld [vmem:[#allocation2] sm:$0xff]
        %v755 = vld [vmem:[#allocation2 + $0x8] sm:$0xff]
        %s756 = scalar_lea.vmem %s280, 48
        %v757 = vld [vmem:[%s756] sm:$0xff]
        %v758 = vld [vmem:[%s756 + $0x8] sm:$0xff]
        %v759 = vmul.f32 %v757, %v757
        %v760 = vmul.f32 %v758, %v758
        %763 = vrot.lane.b32.xlu0 %v759, 127
        %v764 = vpop.permute.xlu0 %763
        %765 = vrot.lane.b32.xlu0 %v760, 127
        %v766 = vpop.permute.xlu0 %765
        %v769 = vadd.f32 %v759, %v764
        %v770 = vadd.f32 %v760, %v766
        %771 = vrot.lane.b32.xlu0 %v759, 126
        %v772 = vpop.permute.xlu0 %771
        %773 = vrot.lane.b32.xlu0 %v760, 126
        %v774 = vpop.permute.xlu0 %773
        %v777 = vadd.f32 %v769, %v772
        %v778 = vadd.f32 %v770, %v774
        %v779 = vmax.f32 %v777, 1e-24
        %v780 = vmax.f32 %v778, 1e-24
        %v781 = vrsqrt.pop %v779
        %v782 = vmul.f32 %v781, %v779
        %v783 = vmul.f32 %v782, %v781
        %v784 = vmul.f32 0.5, %v783
        %v785 = vsub.f32 1.5, %v784
        %v786 = vmul.f32 %v781, %v785
        %vm787 = vweird.f32 %v779
        %vm788 = vweird.f32 %v781
        %vm789 = vmor %vm787, %vm788
        %v790 = vsel %vm789, %v781, %v786
        %v791 = vrsqrt.pop %v780
        %v792 = vmul.f32 %v791, %v780
        %v793 = vmul.f32 %v792, %v791
        %v794 = vmul.f32 0.5, %v793
        %v795 = vsub.f32 1.5, %v794
        %v796 = vmul.f32 %v791, %v795
        %vm797 = vweird.f32 %v780
        %vm798 = vweird.f32 %v791
        %vm799 = vmor %vm797, %vm798
        %v800 = vsel %vm799, %v791, %v796
        %v801 = vmul.f32 %v757, %v790
        %v802 = vmul.f32 %v758, %v800
        %v803 = vadd.f32 %v801, 1.0
        %v804 = vadd.f32 %v802, 1.0
        %v805 = vmul.f32 %v803, 0.5
        %v806 = vmul.f32 %v804, 0.5
        %809 = vrot.lane.b32.xlu0 %v790, 1
        %v810 = vpop.permute.xlu0 %809
        %811 = vrot.lane.b32.xlu0 %v800, 1
        %v812 = vpop.permute.xlu0 %811
        %v815 = vmul.f32 %v757, %v810
        %v816 = vmul.f32 %v758, %v812
        %v817 = vadd.f32 %v815, 1.0
        %v818 = vadd.f32 %v816, 1.0
        %v819 = vmul.f32 %v817, 0.5
        %v820 = vmul.f32 %v818, 0.5
        %821 = vrot.lane.b32.xlu0 %v790, 2
        %v822 = vpop.permute.xlu0 %821
        %823 = vrot.lane.b32.xlu0 %v800, 2
        %v824 = vpop.permute.xlu0 %823
        %v827 = vmul.f32 %v757, %v822
        %v828 = vmul.f32 %v758, %v824
        %v829 = vadd.f32 %v827, 1.0
        %v830 = vadd.f32 %v828, 1.0
        %v831 = vmul.f32 %v829, 0.5
        %v832 = vmul.f32 %v830, 0.5
        %834 = vset.pattern.permute.xlu0 0
        %835 = vperm.xlu0 %834, %v805
        %v836 = vpop.permute.xlu0 %835
        %839 = vset.pattern.permute.xlu0 0
        %840 = vperm.xlu0 %839, %v806
        %v841 = vpop.permute.xlu0 %840
        %v843 = vmul.f32 %v836, %v394
        %v844 = vmul.f32 %v841, %v394
        %846 = vset.pattern.permute.xlu0 1
        %847 = vperm.xlu0 %846, %v819
        %v848 = vpop.permute.xlu0 %847
        %851 = vset.pattern.permute.xlu0 1
        %852 = vperm.xlu0 %851, %v820
        %v853 = vpop.permute.xlu0 %852
        %v855 = vmul.f32 %v848, %v407
        %v856 = vmul.f32 %v853, %v407
        %v857 = vadd.f32 %v843, %v855
        %v858 = vadd.f32 %v844, %v856
        %860 = vset.pattern.permute.xlu0 2
        %861 = vperm.xlu0 %860, %v831
        %v862 = vpop.permute.xlu0 %861
        %865 = vset.pattern.permute.xlu0 2
        %866 = vperm.xlu0 %865, %v832
        %v867 = vpop.permute.xlu0 %866
        %v869 = vmul.f32 %v862, %v422
        %v870 = vmul.f32 %v867, %v422
        %v871 = vadd.f32 %v857, %v869
        %v872 = vadd.f32 %v858, %v870
        %v873 = vadd.f32 %v871, %v427
        %v874 = vadd.f32 %v872, %v427
        %v875 = vmax.f32 %v873, 0.0
        %v876 = vmax.f32 %v874, 0.0
        %v877 = vmul.f32 %v754, %v433
        %v878 = vmul.f32 %v755, %v433
        %v879 = vadd.f32 %v877, %v438
        %v880 = vadd.f32 %v878, %v438
        %v881 = vmax.f32 %v879, 0.0
        %v882 = vmax.f32 %v880, 0.0
        %v883 = vmul.f32 %v881, %v875
        %v884 = vmul.f32 %v882, %v876
        %v885 = vmax.f32 %v738, %v883
        %v886 = vmax.f32 %v739, %v884
        loop: start=0, step=1, limit=16
        $region69: #{conv_layer_forward.1} parent=39 // loop_pre_header
          _
        $region70: #{conv_layer_forward.1} parent=39 // loop_header
          %s888 = sphi 0, %s892
          %p889 = scmp.ge.s32.totalorder %s888, 16
        $region71: #{conv_layer_forward.1} parent=39 // loop_header_branch
          %891 = sbr.rel (%p889) target = $region75
        $region72: #{conv_layer_forward.1} parent=39 // loop_body
          %s893 = smul.u32 %s888, 8
          %s894 = sadd.s32 %s286, %s893
          %s895 = sadd.s32 %s894, 4
          %s896 = sld [smem:[#allocation4 + %s895]]
          %s897 = scalar_lea.vmem %s271, %s896
          %v898 = vld [vmem:[%s897] sm:$0x1]
          %s899 = scalar_lea.vmem [#allocation2], %s888
          %900 = vst [vmem:[%s899] sm:$0x1] %v898
        $region73: #{conv_layer_forward.1} parent=39 // loop_footer
          %s892 = sadd.s32 1, %s888
        $region74: #{conv_layer_forward.1} parent=39 // loop_footer_branch
          %887 = sbr.rel target = $region70
        $region75: #{conv_layer_forward.1} parent=39 // loop_exit
          _
        %v901 = vld [vmem:[#allocation2] sm:$0xff]
        %v902 = vld [vmem:[#allocation2 + $0x8] sm:$0xff]
        %s903 = scalar_lea.vmem %s280, 64
        %v904 = vld [vmem:[%s903] sm:$0xff]
        %v905 = vld [vmem:[%s903 + $0x8] sm:$0xff]
        %v906 = vmul.f32 %v904, %v904
        %v907 = vmul.f32 %v905, %v905
        %910 = vrot.lane.b32.xlu0 %v906, 127
        %v911 = vpop.permute.xlu0 %910
        %912 = vrot.lane.b32.xlu0 %v907, 127
        %v913 = vpop.permute.xlu0 %912
        %v916 = vadd.f32 %v906, %v911
        %v917 = vadd.f32 %v907, %v913
        %918 = vrot.lane.b32.xlu0 %v906, 126
        %v919 = vpop.permute.xlu0 %918
        %920 = vrot.lane.b32.xlu0 %v907, 126
        %v921 = vpop.permute.xlu0 %920
        %v924 = vadd.f32 %v916, %v919
        %v925 = vadd.f32 %v917, %v921
        %v926 = vmax.f32 %v924, 1e-24
        %v927 = vmax.f32 %v925, 1e-24
        %v928 = vrsqrt.pop %v926
        %v929 = vmul.f32 %v928, %v926
        %v930 = vmul.f32 %v929, %v928
        %v931 = vmul.f32 0.5, %v930
        %v932 = vsub.f32 1.5, %v931
        %v933 = vmul.f32 %v928, %v932
        %vm934 = vweird.f32 %v926
        %vm935 = vweird.f32 %v928
        %vm936 = vmor %vm934, %vm935
        %v937 = vsel %vm936, %v928, %v933
        %v938 = vrsqrt.pop %v927
        %v939 = vmul.f32 %v938, %v927
        %v940 = vmul.f32 %v939, %v938
        %v941 = vmul.f32 0.5, %v940
        %v942 = vsub.f32 1.5, %v941
        %v943 = vmul.f32 %v938, %v942
        %vm944 = vweird.f32 %v927
        %vm945 = vweird.f32 %v938
        %vm946 = vmor %vm944, %vm945
        %v947 = vsel %vm946, %v938, %v943
        %v948 = vmul.f32 %v904, %v937
        %v949 = vmul.f32 %v905, %v947
        %v950 = vadd.f32 %v948, 1.0
        %v951 = vadd.f32 %v949, 1.0
        %v952 = vmul.f32 %v950, 0.5
        %v953 = vmul.f32 %v951, 0.5
        %956 = vrot.lane.b32.xlu0 %v937, 1
        %v957 = vpop.permute.xlu0 %956
        %958 = vrot.lane.b32.xlu0 %v947, 1
        %v959 = vpop.permute.xlu0 %958
        %v962 = vmul.f32 %v904, %v957
        %v963 = vmul.f32 %v905, %v959
        %v964 = vadd.f32 %v962, 1.0
        %v965 = vadd.f32 %v963, 1.0
        %v966 = vmul.f32 %v964, 0.5
        %v967 = vmul.f32 %v965, 0.5
        %968 = vrot.lane.b32.xlu0 %v937, 2
        %v969 = vpop.permute.xlu0 %968
        %970 = vrot.lane.b32.xlu0 %v947, 2
        %v971 = vpop.permute.xlu0 %970
        %v974 = vmul.f32 %v904, %v969
        %v975 = vmul.f32 %v905, %v971
        %v976 = vadd.f32 %v974, 1.0
        %v977 = vadd.f32 %v975, 1.0
        %v978 = vmul.f32 %v976, 0.5
        %v979 = vmul.f32 %v977, 0.5
        %981 = vset.pattern.permute.xlu0 0
        %982 = vperm.xlu0 %981, %v952
        %v983 = vpop.permute.xlu0 %982
        %986 = vset.pattern.permute.xlu0 0
        %987 = vperm.xlu0 %986, %v953
        %v988 = vpop.permute.xlu0 %987
        %v990 = vmul.f32 %v983, %v394
        %v991 = vmul.f32 %v988, %v394
        %993 = vset.pattern.permute.xlu0 1
        %994 = vperm.xlu0 %993, %v966
        %v995 = vpop.permute.xlu0 %994
        %998 = vset.pattern.permute.xlu0 1
        %999 = vperm.xlu0 %998, %v967
        %v1000 = vpop.permute.xlu0 %999
        %v1002 = vmul.f32 %v995, %v407
        %v1003 = vmul.f32 %v1000, %v407
        %v1004 = vadd.f32 %v990, %v1002
        %v1005 = vadd.f32 %v991, %v1003
        %1007 = vset.pattern.permute.xlu0 2
        %1008 = vperm.xlu0 %1007, %v978
        %v1009 = vpop.permute.xlu0 %1008
        %1012 = vset.pattern.permute.xlu0 2
        %1013 = vperm.xlu0 %1012, %v979
        %v1014 = vpop.permute.xlu0 %1013
        %v1016 = vmul.f32 %v1009, %v422
        %v1017 = vmul.f32 %v1014, %v422
        %v1018 = vadd.f32 %v1004, %v1016
        %v1019 = vadd.f32 %v1005, %v1017
        %v1020 = vadd.f32 %v1018, %v427
        %v1021 = vadd.f32 %v1019, %v427
        %v1022 = vmax.f32 %v1020, 0.0
        %v1023 = vmax.f32 %v1021, 0.0
        %v1024 = vmul.f32 %v901, %v433
        %v1025 = vmul.f32 %v902, %v433
        %v1026 = vadd.f32 %v1024, %v438
        %v1027 = vadd.f32 %v1025, %v438
        %v1028 = vmax.f32 %v1026, 0.0
        %v1029 = vmax.f32 %v1027, 0.0
        %v1030 = vmul.f32 %v1028, %v1022
        %v1031 = vmul.f32 %v1029, %v1023
        %v1032 = vmax.f32 %v885, %v1030
        %v1033 = vmax.f32 %v886, %v1031
        loop: start=0, step=1, limit=16
        $region76: #{conv_layer_forward.1} parent=39 // loop_pre_header
          _
        $region77: #{conv_layer_forward.1} parent=39 // loop_header
          %s1035 = sphi 0, %s1039
          %p1036 = scmp.ge.s32.totalorder %s1035, 16
        $region78: #{conv_layer_forward.1} parent=39 // loop_header_branch
          %1038 = sbr.rel (%p1036) target = $region82
        $region79: #{conv_layer_forward.1} parent=39 // loop_body
          %s1040 = smul.u32 %s1035, 8
          %s1041 = sadd.s32 %s286, %s1040
          %s1042 = sadd.s32 %s1041, 5
          %s1043 = sld [smem:[#allocation4 + %s1042]]
          %s1044 = scalar_lea.vmem %s271, %s1043
          %v1045 = vld [vmem:[%s1044] sm:$0x1]
          %s1046 = scalar_lea.vmem [#allocation2], %s1035
          %1047 = vst [vmem:[%s1046] sm:$0x1] %v1045
        $region80: #{conv_layer_forward.1} parent=39 // loop_footer
          %s1039 = sadd.s32 1, %s1035
        $region81: #{conv_layer_forward.1} parent=39 // loop_footer_branch
          %1034 = sbr.rel target = $region77
        $region82: #{conv_layer_forward.1} parent=39 // loop_exit
          _
        %v1048 = vld [vmem:[#allocation2] sm:$0xff]
        %v1049 = vld [vmem:[#allocation2 + $0x8] sm:$0xff]
        %s1050 = scalar_lea.vmem %s280, 80
        %v1051 = vld [vmem:[%s1050] sm:$0xff]
        %v1052 = vld [vmem:[%s1050 + $0x8] sm:$0xff]
        %v1053 = vmul.f32 %v1051, %v1051
        %v1054 = vmul.f32 %v1052, %v1052
        %1057 = vrot.lane.b32.xlu0 %v1053, 127
        %v1058 = vpop.permute.xlu0 %1057
        %1059 = vrot.lane.b32.xlu0 %v1054, 127
        %v1060 = vpop.permute.xlu0 %1059
        %v1063 = vadd.f32 %v1053, %v1058
        %v1064 = vadd.f32 %v1054, %v1060
        %1065 = vrot.lane.b32.xlu0 %v1053, 126
        %v1066 = vpop.permute.xlu0 %1065
        %1067 = vrot.lane.b32.xlu0 %v1054, 126
        %v1068 = vpop.permute.xlu0 %1067
        %v1071 = vadd.f32 %v1063, %v1066
        %v1072 = vadd.f32 %v1064, %v1068
        %v1073 = vmax.f32 %v1071, 1e-24
        %v1074 = vmax.f32 %v1072, 1e-24
        %v1075 = vrsqrt.pop %v1073
        %v1076 = vmul.f32 %v1075, %v1073
        %v1077 = vmul.f32 %v1076, %v1075
        %v1078 = vmul.f32 0.5, %v1077
        %v1079 = vsub.f32 1.5, %v1078
        %v1080 = vmul.f32 %v1075, %v1079
        %vm1081 = vweird.f32 %v1073
        %vm1082 = vweird.f32 %v1075
        %vm1083 = vmor %vm1081, %vm1082
        %v1084 = vsel %vm1083, %v1075, %v1080
        %v1085 = vrsqrt.pop %v1074
        %v1086 = vmul.f32 %v1085, %v1074
        %v1087 = vmul.f32 %v1086, %v1085
        %v1088 = vmul.f32 0.5, %v1087
        %v1089 = vsub.f32 1.5, %v1088
        %v1090 = vmul.f32 %v1085, %v1089
        %vm1091 = vweird.f32 %v1074
        %vm1092 = vweird.f32 %v1085
        %vm1093 = vmor %vm1091, %vm1092
        %v1094 = vsel %vm1093, %v1085, %v1090
        %v1095 = vmul.f32 %v1051, %v1084
        %v1096 = vmul.f32 %v1052, %v1094
        %v1097 = vadd.f32 %v1095, 1.0
        %v1098 = vadd.f32 %v1096, 1.0
        %v1099 = vmul.f32 %v1097, 0.5
        %v1100 = vmul.f32 %v1098, 0.5
        %1103 = vrot.lane.b32.xlu0 %v1084, 1
        %v1104 = vpop.permute.xlu0 %1103
        %1105 = vrot.lane.b32.xlu0 %v1094, 1
        %v1106 = vpop.permute.xlu0 %1105
        %v1109 = vmul.f32 %v1051, %v1104
        %v1110 = vmul.f32 %v1052, %v1106
        %v1111 = vadd.f32 %v1109, 1.0
        %v1112 = vadd.f32 %v1110, 1.0
        %v1113 = vmul.f32 %v1111, 0.5
        %v1114 = vmul.f32 %v1112, 0.5
        %1115 = vrot.lane.b32.xlu0 %v1084, 2
        %v1116 = vpop.permute.xlu0 %1115
        %1117 = vrot.lane.b32.xlu0 %v1094, 2
        %v1118 = vpop.permute.xlu0 %1117
        %v1121 = vmul.f32 %v1051, %v1116
        %v1122 = vmul.f32 %v1052, %v1118
        %v1123 = vadd.f32 %v1121, 1.0
        %v1124 = vadd.f32 %v1122, 1.0
        %v1125 = vmul.f32 %v1123, 0.5
        %v1126 = vmul.f32 %v1124, 0.5
        %1128 = vset.pattern.permute.xlu0 0
        %1129 = vperm.xlu0 %1128, %v1099
        %v1130 = vpop.permute.xlu0 %1129
        %1133 = vset.pattern.permute.xlu0 0
        %1134 = vperm.xlu0 %1133, %v1100
        %v1135 = vpop.permute.xlu0 %1134
        %v1137 = vmul.f32 %v1130, %v394
        %v1138 = vmul.f32 %v1135, %v394
        %1140 = vset.pattern.permute.xlu0 1
        %1141 = vperm.xlu0 %1140, %v1113
        %v1142 = vpop.permute.xlu0 %1141
        %1145 = vset.pattern.permute.xlu0 1
        %1146 = vperm.xlu0 %1145, %v1114
        %v1147 = vpop.permute.xlu0 %1146
        %v1149 = vmul.f32 %v1142, %v407
        %v1150 = vmul.f32 %v1147, %v407
        %v1151 = vadd.f32 %v1137, %v1149
        %v1152 = vadd.f32 %v1138, %v1150
        %1154 = vset.pattern.permute.xlu0 2
        %1155 = vperm.xlu0 %1154, %v1125
        %v1156 = vpop.permute.xlu0 %1155
        %1159 = vset.pattern.permute.xlu0 2
        %1160 = vperm.xlu0 %1159, %v1126
        %v1161 = vpop.permute.xlu0 %1160
        %v1163 = vmul.f32 %v1156, %v422
        %v1164 = vmul.f32 %v1161, %v422
        %v1165 = vadd.f32 %v1151, %v1163
        %v1166 = vadd.f32 %v1152, %v1164
        %v1167 = vadd.f32 %v1165, %v427
        %v1168 = vadd.f32 %v1166, %v427
        %v1169 = vmax.f32 %v1167, 0.0
        %v1170 = vmax.f32 %v1168, 0.0
        %v1171 = vmul.f32 %v1048, %v433
        %v1172 = vmul.f32 %v1049, %v433
        %v1173 = vadd.f32 %v1171, %v438
        %v1174 = vadd.f32 %v1172, %v438
        %v1175 = vmax.f32 %v1173, 0.0
        %v1176 = vmax.f32 %v1174, 0.0
        %v1177 = vmul.f32 %v1175, %v1169
        %v1178 = vmul.f32 %v1176, %v1170
        %v1179 = vmax.f32 %v1032, %v1177
        %v1180 = vmax.f32 %v1033, %v1178
        loop: start=0, step=1, limit=16
        $region83: #{conv_layer_forward.1} parent=39 // loop_pre_header
          _
        $region84: #{conv_layer_forward.1} parent=39 // loop_header
          %s1182 = sphi 0, %s1186
          %p1183 = scmp.ge.s32.totalorder %s1182, 16
        $region85: #{conv_layer_forward.1} parent=39 // loop_header_branch
          %1185 = sbr.rel (%p1183) target = $region89
        $region86: #{conv_layer_forward.1} parent=39 // loop_body
          %s1187 = smul.u32 %s1182, 8
          %s1188 = sadd.s32 %s286, %s1187
          %s1189 = sadd.s32 %s1188, 6
          %s1190 = sld [smem:[#allocation4 + %s1189]]
          %s1191 = scalar_lea.vmem %s271, %s1190
          %v1192 = vld [vmem:[%s1191] sm:$0x1]
          %s1193 = scalar_lea.vmem [#allocation2], %s1182
          %1194 = vst [vmem:[%s1193] sm:$0x1] %v1192
        $region87: #{conv_layer_forward.1} parent=39 // loop_footer
          %s1186 = sadd.s32 1, %s1182
        $region88: #{conv_layer_forward.1} parent=39 // loop_footer_branch
          %1181 = sbr.rel target = $region84
        $region89: #{conv_layer_forward.1} parent=39 // loop_exit
          _
        %v1195 = vld [vmem:[#allocation2] sm:$0xff]
        %v1196 = vld [vmem:[#allocation2 + $0x8] sm:$0xff]
        %s1197 = scalar_lea.vmem %s280, 96
        %v1198 = vld [vmem:[%s1197] sm:$0xff]
        %v1199 = vld [vmem:[%s1197 + $0x8] sm:$0xff]
        %v1200 = vmul.f32 %v1198, %v1198
        %v1201 = vmul.f32 %v1199, %v1199
        %1204 = vrot.lane.b32.xlu0 %v1200, 127
        %v1205 = vpop.permute.xlu0 %1204
        %1206 = vrot.lane.b32.xlu0 %v1201, 127
        %v1207 = vpop.permute.xlu0 %1206
        %v1210 = vadd.f32 %v1200, %v1205
        %v1211 = vadd.f32 %v1201, %v1207
        %1212 = vrot.lane.b32.xlu0 %v1200, 126
        %v1213 = vpop.permute.xlu0 %1212
        %1214 = vrot.lane.b32.xlu0 %v1201, 126
        %v1215 = vpop.permute.xlu0 %1214
        %v1218 = vadd.f32 %v1210, %v1213
        %v1219 = vadd.f32 %v1211, %v1215
        %v1220 = vmax.f32 %v1218, 1e-24
        %v1221 = vmax.f32 %v1219, 1e-24
        %v1222 = vrsqrt.pop %v1220
        %v1223 = vmul.f32 %v1222, %v1220
        %v1224 = vmul.f32 %v1223, %v1222
        %v1225 = vmul.f32 0.5, %v1224
        %v1226 = vsub.f32 1.5, %v1225
        %v1227 = vmul.f32 %v1222, %v1226
        %vm1228 = vweird.f32 %v1220
        %vm1229 = vweird.f32 %v1222
        %vm1230 = vmor %vm1228, %vm1229
        %v1231 = vsel %vm1230, %v1222, %v1227
        %v1232 = vrsqrt.pop %v1221
        %v1233 = vmul.f32 %v1232, %v1221
        %v1234 = vmul.f32 %v1233, %v1232
        %v1235 = vmul.f32 0.5, %v1234
        %v1236 = vsub.f32 1.5, %v1235
        %v1237 = vmul.f32 %v1232, %v1236
        %vm1238 = vweird.f32 %v1221
        %vm1239 = vweird.f32 %v1232
        %vm1240 = vmor %vm1238, %vm1239
        %v1241 = vsel %vm1240, %v1232, %v1237
        %v1242 = vmul.f32 %v1198, %v1231
        %v1243 = vmul.f32 %v1199, %v1241
        %v1244 = vadd.f32 %v1242, 1.0
        %v1245 = vadd.f32 %v1243, 1.0
        %v1246 = vmul.f32 %v1244, 0.5
        %v1247 = vmul.f32 %v1245, 0.5
        %1250 = vrot.lane.b32.xlu0 %v1231, 1
        %v1251 = vpop.permute.xlu0 %1250
        %1252 = vrot.lane.b32.xlu0 %v1241, 1
        %v1253 = vpop.permute.xlu0 %1252
        %v1256 = vmul.f32 %v1198, %v1251
        %v1257 = vmul.f32 %v1199, %v1253
        %v1258 = vadd.f32 %v1256, 1.0
        %v1259 = vadd.f32 %v1257, 1.0
        %v1260 = vmul.f32 %v1258, 0.5
        %v1261 = vmul.f32 %v1259, 0.5
        %1262 = vrot.lane.b32.xlu0 %v1231, 2
        %v1263 = vpop.permute.xlu0 %1262
        %1264 = vrot.lane.b32.xlu0 %v1241, 2
        %v1265 = vpop.permute.xlu0 %1264
        %v1268 = vmul.f32 %v1198, %v1263
        %v1269 = vmul.f32 %v1199, %v1265
        %v1270 = vadd.f32 %v1268, 1.0
        %v1271 = vadd.f32 %v1269, 1.0
        %v1272 = vmul.f32 %v1270, 0.5
        %v1273 = vmul.f32 %v1271, 0.5
        %1275 = vset.pattern.permute.xlu0 0
        %1276 = vperm.xlu0 %1275, %v1246
        %v1277 = vpop.permute.xlu0 %1276
        %1280 = vset.pattern.permute.xlu0 0
        %1281 = vperm.xlu0 %1280, %v1247
        %v1282 = vpop.permute.xlu0 %1281
        %v1284 = vmul.f32 %v1277, %v394
        %v1285 = vmul.f32 %v1282, %v394
        %1287 = vset.pattern.permute.xlu0 1
        %1288 = vperm.xlu0 %1287, %v1260
        %v1289 = vpop.permute.xlu0 %1288
        %1292 = vset.pattern.permute.xlu0 1
        %1293 = vperm.xlu0 %1292, %v1261
        %v1294 = vpop.permute.xlu0 %1293
        %v1296 = vmul.f32 %v1289, %v407
        %v1297 = vmul.f32 %v1294, %v407
        %v1298 = vadd.f32 %v1284, %v1296
        %v1299 = vadd.f32 %v1285, %v1297
        %1301 = vset.pattern.permute.xlu0 2
        %1302 = vperm.xlu0 %1301, %v1272
        %v1303 = vpop.permute.xlu0 %1302
        %1306 = vset.pattern.permute.xlu0 2
        %1307 = vperm.xlu0 %1306, %v1273
        %v1308 = vpop.permute.xlu0 %1307
        %v1310 = vmul.f32 %v1303, %v422
        %v1311 = vmul.f32 %v1308, %v422
        %v1312 = vadd.f32 %v1298, %v1310
        %v1313 = vadd.f32 %v1299, %v1311
        %v1314 = vadd.f32 %v1312, %v427
        %v1315 = vadd.f32 %v1313, %v427
        %v1316 = vmax.f32 %v1314, 0.0
        %v1317 = vmax.f32 %v1315, 0.0
        %v1318 = vmul.f32 %v1195, %v433
        %v1319 = vmul.f32 %v1196, %v433
        %v1320 = vadd.f32 %v1318, %v438
        %v1321 = vadd.f32 %v1319, %v438
        %v1322 = vmax.f32 %v1320, 0.0
        %v1323 = vmax.f32 %v1321, 0.0
        %v1324 = vmul.f32 %v1322, %v1316
        %v1325 = vmul.f32 %v1323, %v1317
        %v1326 = vmax.f32 %v1179, %v1324
        %v1327 = vmax.f32 %v1180, %v1325
        loop: start=0, step=1, limit=16
        $region90: #{conv_layer_forward.1} parent=39 // loop_pre_header
          _
        $region91: #{conv_layer_forward.1} parent=39 // loop_header
          %s1329 = sphi 0, %s1333
          %p1330 = scmp.ge.s32.totalorder %s1329, 16
        $region92: #{conv_layer_forward.1} parent=39 // loop_header_branch
          %1332 = sbr.rel (%p1330) target = $region96
        $region93: #{conv_layer_forward.1} parent=39 // loop_body
          %s1334 = smul.u32 %s1329, 8
          %s1335 = sadd.s32 %s286, %s1334
          %s1336 = sadd.s32 %s1335, 7
          %s1337 = sld [smem:[#allocation4 + %s1336]]
          %s1338 = scalar_lea.vmem %s271, %s1337
          %v1339 = vld [vmem:[%s1338] sm:$0x1]
          %s1340 = scalar_lea.vmem [#allocation2], %s1329
          %1341 = vst [vmem:[%s1340] sm:$0x1] %v1339
        $region94: #{conv_layer_forward.1} parent=39 // loop_footer
          %s1333 = sadd.s32 1, %s1329
        $region95: #{conv_layer_forward.1} parent=39 // loop_footer_branch
          %1328 = sbr.rel target = $region91
        $region96: #{conv_layer_forward.1} parent=39 // loop_exit
          _
        %v1342 = vld [vmem:[#allocation2] sm:$0xff]
        %v1343 = vld [vmem:[#allocation2 + $0x8] sm:$0xff]
        %s1344 = scalar_lea.vmem %s280, 112
        %v1345 = vld [vmem:[%s1344] sm:$0xff]
        %v1346 = vld [vmem:[%s1344 + $0x8] sm:$0xff]
        %v1347 = vmul.f32 %v1345, %v1345
        %v1348 = vmul.f32 %v1346, %v1346
        %1351 = vrot.lane.b32.xlu0 %v1347, 127
        %v1352 = vpop.permute.xlu0 %1351
        %1353 = vrot.lane.b32.xlu0 %v1348, 127
        %v1354 = vpop.permute.xlu0 %1353
        %v1357 = vadd.f32 %v1347, %v1352
        %v1358 = vadd.f32 %v1348, %v1354
        %1359 = vrot.lane.b32.xlu0 %v1347, 126
        %v1360 = vpop.permute.xlu0 %1359
        %1361 = vrot.lane.b32.xlu0 %v1348, 126
        %v1362 = vpop.permute.xlu0 %1361
        %v1365 = vadd.f32 %v1357, %v1360
        %v1366 = vadd.f32 %v1358, %v1362
        %v1367 = vmax.f32 %v1365, 1e-24
        %v1368 = vmax.f32 %v1366, 1e-24
        %v1369 = vrsqrt.pop %v1367
        %v1370 = vmul.f32 %v1369, %v1367
        %v1371 = vmul.f32 %v1370, %v1369
        %v1372 = vmul.f32 0.5, %v1371
        %v1373 = vsub.f32 1.5, %v1372
        %v1374 = vmul.f32 %v1369, %v1373
        %vm1375 = vweird.f32 %v1367
        %vm1376 = vweird.f32 %v1369
        %vm1377 = vmor %vm1375, %vm1376
        %v1378 = vsel %vm1377, %v1369, %v1374
        %v1379 = vrsqrt.pop %v1368
        %v1380 = vmul.f32 %v1379, %v1368
        %v1381 = vmul.f32 %v1380, %v1379
        %v1382 = vmul.f32 0.5, %v1381
        %v1383 = vsub.f32 1.5, %v1382
        %v1384 = vmul.f32 %v1379, %v1383
        %vm1385 = vweird.f32 %v1368
        %vm1386 = vweird.f32 %v1379
        %vm1387 = vmor %vm1385, %vm1386
        %v1388 = vsel %vm1387, %v1379, %v1384
        %v1389 = vmul.f32 %v1345, %v1378
        %v1390 = vmul.f32 %v1346, %v1388
        %v1391 = vadd.f32 %v1389, 1.0
        %v1392 = vadd.f32 %v1390, 1.0
        %v1393 = vmul.f32 %v1391, 0.5
        %v1394 = vmul.f32 %v1392, 0.5
        %1397 = vrot.lane.b32.xlu0 %v1378, 1
        %v1398 = vpop.permute.xlu0 %1397
        %1399 = vrot.lane.b32.xlu0 %v1388, 1
        %v1400 = vpop.permute.xlu0 %1399
        %v1403 = vmul.f32 %v1345, %v1398
        %v1404 = vmul.f32 %v1346, %v1400
        %v1405 = vadd.f32 %v1403, 1.0
        %v1406 = vadd.f32 %v1404, 1.0
        %v1407 = vmul.f32 %v1405, 0.5
        %v1408 = vmul.f32 %v1406, 0.5
        %1409 = vrot.lane.b32.xlu0 %v1378, 2
        %v1410 = vpop.permute.xlu0 %1409
        %1411 = vrot.lane.b32.xlu0 %v1388, 2
        %v1412 = vpop.permute.xlu0 %1411
        %v1415 = vmul.f32 %v1345, %v1410
        %v1416 = vmul.f32 %v1346, %v1412
        %v1417 = vadd.f32 %v1415, 1.0
        %v1418 = vadd.f32 %v1416, 1.0
        %v1419 = vmul.f32 %v1417, 0.5
        %v1420 = vmul.f32 %v1418, 0.5
        %1422 = vset.pattern.permute.xlu0 0
        %1423 = vperm.xlu0 %1422, %v1393
        %v1424 = vpop.permute.xlu0 %1423
        %1427 = vset.pattern.permute.xlu0 0
        %1428 = vperm.xlu0 %1427, %v1394
        %v1429 = vpop.permute.xlu0 %1428
        %v1431 = vmul.f32 %v1424, %v394
        %v1432 = vmul.f32 %v1429, %v394
        %1434 = vset.pattern.permute.xlu0 1
        %1435 = vperm.xlu0 %1434, %v1407
        %v1436 = vpop.permute.xlu0 %1435
        %1439 = vset.pattern.permute.xlu0 1
        %1440 = vperm.xlu0 %1439, %v1408
        %v1441 = vpop.permute.xlu0 %1440
        %v1443 = vmul.f32 %v1436, %v407
        %v1444 = vmul.f32 %v1441, %v407
        %v1445 = vadd.f32 %v1431, %v1443
        %v1446 = vadd.f32 %v1432, %v1444
        %1448 = vset.pattern.permute.xlu0 2
        %1449 = vperm.xlu0 %1448, %v1419
        %v1450 = vpop.permute.xlu0 %1449
        %1453 = vset.pattern.permute.xlu0 2
        %1454 = vperm.xlu0 %1453, %v1420
        %v1455 = vpop.permute.xlu0 %1454
        %v1457 = vmul.f32 %v1450, %v422
        %v1458 = vmul.f32 %v1455, %v422
        %v1459 = vadd.f32 %v1445, %v1457
        %v1460 = vadd.f32 %v1446, %v1458
        %v1461 = vadd.f32 %v1459, %v427
        %v1462 = vadd.f32 %v1460, %v427
        %v1463 = vmax.f32 %v1461, 0.0
        %v1464 = vmax.f32 %v1462, 0.0
        %v1465 = vmul.f32 %v1342, %v433
        %v1466 = vmul.f32 %v1343, %v433
        %v1467 = vadd.f32 %v1465, %v438
        %v1468 = vadd.f32 %v1466, %v438
        %v1469 = vmax.f32 %v1467, 0.0
        %v1470 = vmax.f32 %v1468, 0.0
        %v1471 = vmul.f32 %v1469, %v1463
        %v1472 = vmul.f32 %v1470, %v1464
        %v1473 = vmax.f32 %v1326, %v1471
        %v1474 = vmax.f32 %v1327, %v1472
        %1475 = vst [vmem:[%s266] sm:$0xff] %v1473
        %1476 = vst [vmem:[%s266 + $0x8] sm:$0xff] %v1474
        %s1477 = sand.u32 %s167, 1
        %s1478 = scalar_lea.sflag [#allocation6], %s1477
        %s1479 = sand.u32 %s167, 1
        %s1480 = smul.addr %s1479, 16
        %s1481 = scalar_lea.vmem [#allocation5], %s1480
        // Predicated region
        $region97: #{conv_layer_forward.1} parent=39 // pred_check
          %p1482 = pneg %p177
        $region98: #{conv_layer_forward.1} parent=39 // pred_check_branch
          %1484 = sbr.rel (%p1482) target = $region100
        $region99: #{conv_layer_forward.1} parent=39 // pred_region
          %s1485 = smul.u32 2, %s33
          %1487 = vsyncadd %s1478, 0
          %s1488 = smul.addr %s32, 2
          %s1489 = sadd.s32 %s1485, %s1488
          %s1490 = smul.addr %s1489, 8
          %s1491 = scalar_lea.hbm %s6, %s1490
          %s1492 = sshll.u32 %s1481, 4
          %s1493 = int_to_ptr.vmem [resolvable:$true] %s1492
          %s1494 = sshll.u32 %s1491, 4
          %s1495 = int_to_ptr.hbm [resolvable:$true] %s1494
          %1500 = dma.vmem_to_hbm [thread:$0]  %s1493, 256, %s1495, %s1478, 128, 128, 8
        $region100: #{conv_layer_forward.1} parent=39 // pred_fallthru
          _
      $region40: #{conv_layer_forward.1} parent=5 // pred_fallthru
        _
      %p1501 = scmp.le.s32.totalorder 2, %s23
      // Predicated region
      $region101: #{conv_layer_forward.1} parent=5 // pred_check
        %p1502 = pneg %p1501
      $region102: #{conv_layer_forward.1} parent=5 // pred_check_branch
        %1504 = sbr.rel (%p1502) target = $region104
      $region103: #{conv_layer_forward.1} parent=5 // pred_region
        %s1505 = ssub.s32 %s23, 2
        // Predicated region
        $region105: #{conv_layer_forward.1} parent=103 // pred_check
          %p1506 = pneg %p183
        $region106: #{conv_layer_forward.1} parent=103 // pred_check_branch
          %1508 = sbr.rel (%p1506) target = $region108
        $region107: #{conv_layer_forward.1} parent=103 // pred_region
          %s1509 = sand.u32 %s168, 1
          %s1510 = scalar_lea.sflag [#allocation6], %s1509
          %s1511 = sand.u32 %s168, 1
          %s1512 = smul.addr %s1511, 16
          %s1513 = scalar_lea.vmem [#allocation5], %s1512
          %1515 = dma.done %s1510, 256
        $region108: #{conv_layer_forward.1} parent=103 // pred_fallthru
          _
      $region104: #{conv_layer_forward.1} parent=5 // pred_fallthru
        _
    $region6: #{conv_layer_forward.1} parent=1 // loop_footer
      %s27 = sadd.s32 1, %s23
    $region7: #{conv_layer_forward.1} parent=1 // loop_footer_branch
      %22 = sbr.rel target = $region3
    $region8: #{conv_layer_forward.1} parent=1 // loop_exit
      _
    %1516 = vsyncpa [#allocation6], 1
    %s1517 = scalar_lea.sflag [#allocation6], 1
    %1518 = vsyncpa %s1517, 1

</llo_original>
